<compile_context>
chip_gen: v5e
topology: v5e:2x2
jax: 0.10.0
libtpu: 0.0.40
codegen_flags: <defaults>
</compile_context>

<pallas_src>
import functools

import jax
import jax.numpy as jnp
from jax import lax
from jax.experimental import pallas as pl
from jax.experimental.pallas import tpu as pltpu


# -----------------------------------------------------------------------------
# Fused kernel: Conv2d (via im2col + one MXU dot) + bias + ReLU + BatchNorm2d
# -----------------------------------------------------------------------------
def _conv_relu_bn_kernel(x_ref, w_ref, b_ref, g_ref, be_ref, o_ref, ext_ref, col_ref,
                         *, N, Cin, Cout, H, W, K, eps, lpad):
    # x_ref:   (N*Cin, H*W)            flat image, rows = (n, ci)
    # w_ref:   (Cout, K*K*Cin)         columns ordered (kh, kw, ci)
    # b/g/be:  (Cout, 1)
    # o_ref:   (N, Cout, H*W)
    # ext_ref: (N*Cin, H*W + 2*lpad)   zero-extended flat image (scratch)
    # col_ref: (K*K*Cin, N*H*W)        im2col strip (scratch)
    HW = H * W
    NC = N * Cin
    pad = K // 2

    # 1) Zero-extended flat image: out-of-image rows of every shifted window read zeros,
    #    which implements the vertical zero padding for free. Store is lane-tile aligned
    #    (lpad is a multiple of 128).
    ext_ref[...] = jnp.zeros_like(ext_ref)
    ext_ref[:, lpad:lpad + HW] = x_ref[...]

    # 2) im2col: 25 shifted / masked copies of the flat image -> (K*K*Cin, N*H*W).
    #    Lane position p = h*W + w; only horizontal wrap-around needs masking.
    #    Masks depend only on dw -> precompute the 5 of them once (hoisted out of the loop).
    col_w = lax.broadcasted_iota(jnp.int32, (NC, HW), 1) % W
    hmask = {dw: (col_w >= -dw) & (col_w < W - dw)
             for dw in range(-pad, pad + 1) if dw != 0}

    for kh in range(K):
        dh = kh - pad
        for kw in range(K):
            dw = kw - pad
            t = kh * K + kw
            start = lpad + dh * W + dw                          # static slice start
            win = ext_ref[:, start:start + HW]                  # (N*Cin, H*W)
            if dw != 0:                                         # mask horizontal wrap
                win = jnp.where(hmask[dw], win, 0.0)
            for n in range(N):                                  # batch blocks side by side
                col_ref[t * Cin:(t + 1) * Cin, n * HW:(n + 1) * HW] = \
                    win[n * Cin:(n + 1) * Cin, :]

    # 3) Conv as a single MXU contraction: (Cout, K*K*Cin) @ (K*K*Cin, N*H*W).
    y = jnp.dot(w_ref[...], col_ref[...], preferred_element_type=jnp.float32)
    y = jnp.maximum(y + b_ref[...], 0.0)                        # bias + ReLU

    # 4) BatchNorm2d, training semantics (biased variance over N*H*W per channel).
    #    Pure lane reductions on the (Cout, N*H*W) tile; rsqrt goes to the EUP.
    inv_cnt = 1.0 / float(N * HW)
    mean = jnp.sum(y, axis=1, keepdims=True) * inv_cnt          # (Cout, 1)
    d = y - mean
    var = jnp.sum(d * d, axis=1, keepdims=True) * inv_cnt       # (Cout, 1)
    yn = d * lax.rsqrt(var + eps) * g_ref[...] + be_ref[...]    # (Cout, N*H*W)

    # 5) Emit (N, Cout, H*W) directly; the wrapper reshape to (N, Cout, H, W) is free.
    for n in range(N):
        o_ref[n] = yn[:, n * HW:(n + 1) * HW]


# -----------------------------------------------------------------------------
# Wrapper
# -----------------------------------------------------------------------------
def conv2d_block_forward(x_nchw, w_oihw, bias, gamma, beta, *, eps=1e-5):
    N, Cin, H, W = x_nchw.shape
    Cout, _, K, _ = w_oihw.shape
    pad = K // 2
    HW = H * W
    KK = K * K
    # Lane-tile-aligned offset of the image inside the extended scratch; must cover pad*W+pad.
    lpad = ((pad * W + pad + 127) // 128) * 128

    # Free reshapes only (no transpose / pad of the activations).
    x2d = x_nchw.reshape(N * Cin, HW)
    # Single 2-D weight tile for the MXU; columns ordered (kh, kw, ci) to match im2col rows.
    w2d = jnp.transpose(w_oihw, (0, 2, 3, 1)).reshape(Cout, KK * Cin)

    kernel = functools.partial(
        _conv_relu_bn_kernel,
        N=N, Cin=Cin, Cout=Cout, H=H, W=W, K=K, eps=eps, lpad=lpad)

    out = pl.pallas_call(
        kernel,
        out_shape=jax.ShapeDtypeStruct((N, Cout, HW), jnp.float32),
        grid=(1,),
        in_specs=[
            pl.BlockSpec((N * Cin, HW), lambda i: (0, 0)),
            pl.BlockSpec((Cout, KK * Cin), lambda i: (0, 0)),
            pl.BlockSpec((Cout, 1), lambda i: (0, 0)),
            pl.BlockSpec((Cout, 1), lambda i: (0, 0)),
            pl.BlockSpec((Cout, 1), lambda i: (0, 0)),
        ],
        out_specs=pl.BlockSpec((N, Cout, HW), lambda i: (0, 0, 0)),
        scratch_shapes=[
            pltpu.VMEM((N * Cin, HW + 2 * lpad), jnp.float32),   # zero-extended flat image
            pltpu.VMEM((KK * Cin, N * HW), jnp.float32),         # im2col strip
        ],
        compiler_params=pltpu.CompilerParams(dimension_semantics=("arbitrary",)),
    )(x2d, w2d, bias.reshape(Cout, 1), gamma.reshape(Cout, 1), beta.reshape(Cout, 1))

    return out.reshape(N, Cout, H, W)


# -----------------------------------------------------------------------------
# Pure-JAX reference (mirrors PyTorch semantics) for a correctness check.
# -----------------------------------------------------------------------------
def _reference(x_nchw, w_oihw, bias, gamma, beta, *, eps=1e-5):
    conv = lax.conv_general_dilated(
        x_nchw, w_oihw, window_strides=(1, 1), padding=((2, 2), (2, 2)),
        dimension_numbers=("NCHW", "OIHW", "NCHW"),
        precision=lax.Precision.HIGHEST)
    conv = conv + bias[None, :, None, None]
    r = jnp.maximum(conv, 0.0)
    mean = jnp.mean(r, axis=(0, 2, 3), keepdims=True)
    var = jnp.mean((r - mean) ** 2, axis=(0, 2, 3), keepdims=True)
    return ((r - mean) / jnp.sqrt(var + eps)) * gamma[None, :, None, None] \
        + beta[None, :, None, None]


if __name__ == "__main__":
    # Small shapes consistent with the module: N=2, Cin=4, Cout=8, 16x16, k=5.
    N, Cin, Cout, H, W, K = 2, 4, 8, 16, 16, 5

    key = jax.random.PRNGKey(0)
    kx, kw, kb, kg, kbe = jax.random.split(key, 5)

    x = jax.random.normal(kx, (N, Cin, H, W), dtype=jnp.float32)
    # Deterministic synthetic parameters (PyTorch-like scale for conv weight/bias).
    fan_in = Cin * K * K
    bound = 1.0 / jnp.sqrt(fan_in)
    w = jax.random.uniform(kw, (Cout, Cin, K, K), minval=-bound, maxval=bound,
                           dtype=jnp.float32)
    b = jax.random.uniform(kb, (Cout,), minval=-bound, maxval=bound, dtype=jnp.float32)
    gamma = 1.0 + 0.1 * jax.random.normal(kg, (Cout,), dtype=jnp.float32)
    beta = 0.1 * jax.random.normal(kbe, (Cout,), dtype=jnp.float32)

    fwd = jax.jit(conv2d_block_forward)
    out = fwd(x, w, b, gamma, beta)
    out = jax.block_until_ready(out)

    ref = _reference(x, w, b, gamma, beta)
    assert out.shape == (N, Cout, H, W)
    assert jnp.allclose(out, ref, rtol=2e-3, atol=2e-3), \
        f"max abs diff = {jnp.max(jnp.abs(out - ref))}"

    print("KERNEL_OK")
</pallas_src>

<mosaic_0001>
module attributes {stable_mosaic.version = 11 : i64} {
  func.func @_conv_relu_bn_kernel(%arg0: i32, %arg1: memref<8x256xf32, #tpu.memory_space<vmem>>, %arg2: memref<8x100xf32, #tpu.memory_space<vmem>>, %arg3: memref<8x1xf32, #tpu.memory_space<vmem>>, %arg4: memref<8x1xf32, #tpu.memory_space<vmem>>, %arg5: memref<8x1xf32, #tpu.memory_space<vmem>>, %arg6: memref<2x8x256xf32, #tpu.memory_space<vmem>>, %arg7: memref<8x512xf32, #tpu.memory_space<vmem>>, %arg8: memref<100x512xf32, #tpu.memory_space<vmem>>) attributes {dimension_semantics = [#tpu.dimension_semantics<arbitrary>], iteration_bounds = array<i64: 1>, scalar_prefetch = 0 : i64, scratch_operands = 2 : i64, tpu.core_type = #tpu.core_type<tc>, window_params = [{pipeline_mode = #tpu.pipeline_mode<synchronous>, transform_indices = @transform_0, window_bounds = array<i64: 8, 256>}, {pipeline_mode = #tpu.pipeline_mode<synchronous>, transform_indices = @transform_1, window_bounds = array<i64: 8, 100>}, {pipeline_mode = #tpu.pipeline_mode<synchronous>, transform_indices = @transform_2, window_bounds = array<i64: 8, 1>}, {pipeline_mode = #tpu.pipeline_mode<synchronous>, transform_indices = @transform_3, window_bounds = array<i64: 8, 1>}, {pipeline_mode = #tpu.pipeline_mode<synchronous>, transform_indices = @transform_4, window_bounds = array<i64: 8, 1>}, {pipeline_mode = #tpu.pipeline_mode<synchronous>, transform_indices = @transform_5, window_bounds = array<i64: 2, 8, 256>}]} {
    %cst = arith.constant 0.000000e+00 : f32
    %0 = vector.broadcast %cst : f32 to vector<8x512xf32>
    %c0 = arith.constant 0 : index
    %c0_0 = arith.constant 0 : index
    %1 = vector.load %arg7[%c0, %c0_0] : memref<8x512xf32, #tpu.memory_space<vmem>>, vector<8x512xf32>
    tpu.vector_store %arg7[%c0, %c0_0], %0 {strides = array<i32>} : memref<8x512xf32, #tpu.memory_space<vmem>>, vector<8x512xf32>,
    %c0_1 = arith.constant 0 : index
    %c0_2 = arith.constant 0 : index
    %2 = vector.load %arg1[%c0_1, %c0_2] : memref<8x256xf32, #tpu.memory_space<vmem>>, vector<8x256xf32>
    %c0_3 = arith.constant 0 : index
    %c128 = arith.constant 128 : index
    %3 = vector.load %arg7[%c0_3, %c128] : memref<8x512xf32, #tpu.memory_space<vmem>>, vector<8x256xf32>
    tpu.vector_store %arg7[%c0_3, %c128], %2 {strides = array<i32>} : memref<8x512xf32, #tpu.memory_space<vmem>>, vector<8x256xf32>,
    %4 = tpu.iota {dimensions = array<i32: 1>} : vector<8x256xi32>
    %c16_i32 = arith.constant 16 : i32
    %c0_i32 = arith.constant 0 : i32
    %5 = arith.cmpi eq, %c16_i32, %c0_i32 : i32
    %c1_i32 = arith.constant 1 : i32
    %6 = arith.select %5, %c1_i32, %c16_i32 : i32
    %7 = vector.broadcast %6 : i32 to vector<8x256xi32>
    %8 = arith.remsi %4, %7 : vector<8x256xi32>
    %c0_i32_4 = arith.constant 0 : i32
    %9 = vector.broadcast %c0_i32_4 : i32 to vector<8x256xi32>
    %10 = arith.cmpi ne, %8, %9 : vector<8x256xi32>
    %c0_i32_5 = arith.constant 0 : i32
    %11 = vector.broadcast %c0_i32_5 : i32 to vector<8x256xi32>
    %12 = arith.cmpi slt, %8, %11 : vector<8x256xi32>
    %c0_i32_6 = arith.constant 0 : i32
    %13 = arith.cmpi slt, %6, %c0_i32_6 : i32
    %14 = vector.broadcast %13 : i1 to vector<8x256xi1>
    %15 = vector.broadcast %14 : vector<8x256xi1> to vector<8x256xi1>
    %16 = arith.xori %12, %15 : vector<8x256xi1>
    %17 = arith.andi %16, %10 : vector<8x256xi1>
    %18 = vector.broadcast %6 : i32 to vector<8x256xi32>
    %19 = arith.addi %8, %18 : vector<8x256xi32>
    %20 = arith.select %17, %19, %8 : vector<8x256xi1>, vector<8x256xi32>
    %c2_i32 = arith.constant 2 : i32
    %21 = vector.broadcast %c2_i32 : i32 to vector<8x256xi32>
    %22 = arith.cmpi sge, %20, %21 : vector<8x256xi32>
    %c18_i32 = arith.constant 18 : i32
    %23 = vector.broadcast %c18_i32 : i32 to vector<8x256xi32>
    %24 = arith.cmpi slt, %20, %23 : vector<8x256xi32>
    %25 = arith.andi %22, %24 : vector<8x256xi1>
    %c1_i32_7 = arith.constant 1 : i32
    %26 = vector.broadcast %c1_i32_7 : i32 to vector<8x256xi32>
    %27 = arith.cmpi sge, %20, %26 : vector<8x256xi32>
    %c17_i32 = arith.constant 17 : i32
    %28 = vector.broadcast %c17_i32 : i32 to vector<8x256xi32>
    %29 = arith.cmpi slt, %20, %28 : vector<8x256xi32>
    %30 = arith.andi %27, %29 : vector<8x256xi1>
    %c-1_i32 = arith.constant -1 : i32
    %31 = vector.broadcast %c-1_i32 : i32 to vector<8x256xi32>
    %32 = arith.cmpi sge, %20, %31 : vector<8x256xi32>
    %c15_i32 = arith.constant 15 : i32
    %33 = vector.broadcast %c15_i32 : i32 to vector<8x256xi32>
    %34 = arith.cmpi slt, %20, %33 : vector<8x256xi32>
    %35 = arith.andi %32, %34 : vector<8x256xi1>
    %c-2_i32 = arith.constant -2 : i32
    %36 = vector.broadcast %c-2_i32 : i32 to vector<8x256xi32>
    %37 = arith.cmpi sge, %20, %36 : vector<8x256xi32>
    %c14_i32 = arith.constant 14 : i32
    %38 = vector.broadcast %c14_i32 : i32 to vector<8x256xi32>
    %39 = arith.cmpi slt, %20, %38 : vector<8x256xi32>
    %40 = arith.andi %37, %39 : vector<8x256xi1>
    %c0_8 = arith.constant 0 : index
    %c94 = arith.constant 94 : index
    %41 = vector.load %arg7[%c0_8, %c94] : memref<8x512xf32, #tpu.memory_space<vmem>>, vector<8x256xf32>
    %cst_9 = arith.constant 0.000000e+00 : f32
    %42 = vector.broadcast %cst_9 : f32 to vector<8x256xf32>
    %43 = arith.select %25, %41, %42 : vector<8x256xi1>, vector<8x256xf32>
    %44 = vector.extract_strided_slice %43 {offsets = [0, 0], sizes = [4, 256], strides = [1, 1]} : vector<8x256xf32> to vector<4x256xf32>
    %c0_10 = arith.constant 0 : index
    %c0_11 = arith.constant 0 : index
    %45 = vector.load %arg8[%c0_10, %c0_11] : memref<100x512xf32, #tpu.memory_space<vmem>>, vector<4x256xf32>
    tpu.vector_store %arg8[%c0_10, %c0_11], %44 {strides = array<i32>} : memref<100x512xf32, #tpu.memory_space<vmem>>, vector<4x256xf32>,
    %46 = vector.extract_strided_slice %43 {offsets = [4, 0], sizes = [4, 256], strides = [1, 1]} : vector<8x256xf32> to vector<4x256xf32>
    %c0_12 = arith.constant 0 : index
    %c256 = arith.constant 256 : index
    %47 = vector.load %arg8[%c0_12, %c256] : memref<100x512xf32, #tpu.memory_space<vmem>>, vector<4x256xf32>
    tpu.vector_store %arg8[%c0_12, %c256], %46 {strides = array<i32>} : memref<100x512xf32, #tpu.memory_space<vmem>>, vector<4x256xf32>,
    %c0_13 = arith.constant 0 : index
    %c95 = arith.constant 95 : index
    %48 = vector.load %arg7[%c0_13, %c95] : memref<8x512xf32, #tpu.memory_space<vmem>>, vector<8x256xf32>
    %cst_14 = arith.constant 0.000000e+00 : f32
    %49 = vector.broadcast %cst_14 : f32 to vector<8x256xf32>
    %50 = arith.select %30, %48, %49 : vector<8x256xi1>, vector<8x256xf32>
    %51 = vector.extract_strided_slice %50 {offsets = [0, 0], sizes = [4, 256], strides = [1, 1]} : vector<8x256xf32> to vector<4x256xf32>
    %c4 = arith.constant 4 : index
    %c0_15 = arith.constant 0 : index
    %52 = vector.load %arg8[%c4, %c0_15] : memref<100x512xf32, #tpu.memory_space<vmem>>, vector<4x256xf32>
    tpu.vector_store %arg8[%c4, %c0_15], %51 {strides = array<i32>} : memref<100x512xf32, #tpu.memory_space<vmem>>, vector<4x256xf32>,
    %53 = vector.extract_strided_slice %50 {offsets = [4, 0], sizes = [4, 256], strides = [1, 1]} : vector<8x256xf32> to vector<4x256xf32>
    %c4_16 = arith.constant 4 : index
    %c256_17 = arith.constant 256 : index
    %54 = vector.load %arg8[%c4_16, %c256_17] : memref<100x512xf32, #tpu.memory_space<vmem>>, vector<4x256xf32>
    tpu.vector_store %arg8[%c4_16, %c256_17], %53 {strides = array<i32>} : memref<100x512xf32, #tpu.memory_space<vmem>>, vector<4x256xf32>,
    %c0_18 = arith.constant 0 : index
    %c96 = arith.constant 96 : index
    %55 = vector.load %arg7[%c0_18, %c96] : memref<8x512xf32, #tpu.memory_space<vmem>>, vector<8x256xf32>
    %56 = vector.extract_strided_slice %55 {offsets = [0, 0], sizes = [4, 256], strides = [1, 1]} : vector<8x256xf32> to vector<4x256xf32>
    %c8 = arith.constant 8 : index
    %c0_19 = arith.constant 0 : index
    %57 = vector.load %arg8[%c8, %c0_19] : memref<100x512xf32, #tpu.memory_space<vmem>>, vector<4x256xf32>
    tpu.vector_store %arg8[%c8, %c0_19], %56 {strides = array<i32>} : memref<100x512xf32, #tpu.memory_space<vmem>>, vector<4x256xf32>,
    %58 = vector.extract_strided_slice %55 {offsets = [4, 0], sizes = [4, 256], strides = [1, 1]} : vector<8x256xf32> to vector<4x256xf32>
    %c8_20 = arith.constant 8 : index
    %c256_21 = arith.constant 256 : index
    %59 = vector.load %arg8[%c8_20, %c256_21] : memref<100x512xf32, #tpu.memory_space<vmem>>, vector<4x256xf32>
    tpu.vector_store %arg8[%c8_20, %c256_21], %58 {strides = array<i32>} : memref<100x512xf32, #tpu.memory_space<vmem>>, vector<4x256xf32>,
    %c0_22 = arith.constant 0 : index
    %c97 = arith.constant 97 : index
    %60 = vector.load %arg7[%c0_22, %c97] : memref<8x512xf32, #tpu.memory_space<vmem>>, vector<8x256xf32>
    %cst_23 = arith.constant 0.000000e+00 : f32
    %61 = vector.broadcast %cst_23 : f32 to vector<8x256xf32>
    %62 = arith.select %35, %60, %61 : vector<8x256xi1>, vector<8x256xf32>
    %63 = vector.extract_strided_slice %62 {offsets = [0, 0], sizes = [4, 256], strides = [1, 1]} : vector<8x256xf32> to vector<4x256xf32>
    %c12 = arith.constant 12 : index
    %c0_24 = arith.constant 0 : index
    %64 = vector.load %arg8[%c12, %c0_24] : memref<100x512xf32, #tpu.memory_space<vmem>>, vector<4x256xf32>
    tpu.vector_store %arg8[%c12, %c0_24], %63 {strides = array<i32>} : memref<100x512xf32, #tpu.memory_space<vmem>>, vector<4x256xf32>,
    %65 = vector.extract_strided_slice %62 {offsets = [4, 0], sizes = [4, 256], strides = [1, 1]} : vector<8x256xf32> to vector<4x256xf32>
    %c12_25 = arith.constant 12 : index
    %c256_26 = arith.constant 256 : index
    %66 = vector.load %arg8[%c12_25, %c256_26] : memref<100x512xf32, #tpu.memory_space<vmem>>, vector<4x256xf32>
    tpu.vector_store %arg8[%c12_25, %c256_26], %65 {strides = array<i32>} : memref<100x512xf32, #tpu.memory_space<vmem>>, vector<4x256xf32>,
    %c0_27 = arith.constant 0 : index
    %c98 = arith.constant 98 : index
    %67 = vector.load %arg7[%c0_27, %c98] : memref<8x512xf32, #tpu.memory_space<vmem>>, vector<8x256xf32>
    %cst_28 = arith.constant 0.000000e+00 : f32
    %68 = vector.broadcast %cst_28 : f32 to vector<8x256xf32>
    %69 = arith.select %40, %67, %68 : vector<8x256xi1>, vector<8x256xf32>
    %70 = vector.extract_strided_slice %69 {offsets = [0, 0], sizes = [4, 256], strides = [1, 1]} : vector<8x256xf32> to vector<4x256xf32>
    %c16 = arith.constant 16 : index
    %c0_29 = arith.constant 0 : index
    %71 = vector.load %arg8[%c16, %c0_29] : memref<100x512xf32, #tpu.memory_space<vmem>>, vector<4x256xf32>
    tpu.vector_store %arg8[%c16, %c0_29], %70 {strides = array<i32>} : memref<100x512xf32, #tpu.memory_space<vmem>>, vector<4x256xf32>,
    %72 = vector.extract_strided_slice %69 {offsets = [4, 0], sizes = [4, 256], strides = [1, 1]} : vector<8x256xf32> to vector<4x256xf32>
    %c16_30 = arith.constant 16 : index
    %c256_31 = arith.constant 256 : index
    %73 = vector.load %arg8[%c16_30, %c256_31] : memref<100x512xf32, #tpu.memory_space<vmem>>, vector<4x256xf32>
    tpu.vector_store %arg8[%c16_30, %c256_31], %72 {strides = array<i32>} : memref<100x512xf32, #tpu.memory_space<vmem>>, vector<4x256xf32>,
    %c0_32 = arith.constant 0 : index
    %c110 = arith.constant 110 : index
    %74 = vector.load %arg7[%c0_32, %c110] : memref<8x512xf32, #tpu.memory_space<vmem>>, vector<8x256xf32>
    %cst_33 = arith.constant 0.000000e+00 : f32
    %75 = vector.broadcast %cst_33 : f32 to vector<8x256xf32>
    %76 = arith.select %25, %74, %75 : vector<8x256xi1>, vector<8x256xf32>
    %77 = vector.extract_strided_slice %76 {offsets = [0, 0], sizes = [4, 256], strides = [1, 1]} : vector<8x256xf32> to vector<4x256xf32>
    %c20 = arith.constant 20 : index
    %c0_34 = arith.constant 0 : index
    %78 = vector.load %arg8[%c20, %c0_34] : memref<100x512xf32, #tpu.memory_space<vmem>>, vector<4x256xf32>
    tpu.vector_store %arg8[%c20, %c0_34], %77 {strides = array<i32>} : memref<100x512xf32, #tpu.memory_space<vmem>>, vector<4x256xf32>,
    %79 = vector.extract_strided_slice %76 {offsets = [4, 0], sizes = [4, 256], strides = [1, 1]} : vector<8x256xf32> to vector<4x256xf32>
    %c20_35 = arith.constant 20 : index
    %c256_36 = arith.constant 256 : index
    %80 = vector.load %arg8[%c20_35, %c256_36] : memref<100x512xf32, #tpu.memory_space<vmem>>, vector<4x256xf32>
    tpu.vector_store %arg8[%c20_35, %c256_36], %79 {strides = array<i32>} : memref<100x512xf32, #tpu.memory_space<vmem>>, vector<4x256xf32>,
    %c0_37 = arith.constant 0 : index
    %c111 = arith.constant 111 : index
    %81 = vector.load %arg7[%c0_37, %c111] : memref<8x512xf32, #tpu.memory_space<vmem>>, vector<8x256xf32>
    %cst_38 = arith.constant 0.000000e+00 : f32
    %82 = vector.broadcast %cst_38 : f32 to vector<8x256xf32>
    %83 = arith.select %30, %81, %82 : vector<8x256xi1>, vector<8x256xf32>
    %84 = vector.extract_strided_slice %83 {offsets = [0, 0], sizes = [4, 256], strides = [1, 1]} : vector<8x256xf32> to vector<4x256xf32>
    %c24 = arith.constant 24 : index
    %c0_39 = arith.constant 0 : index
    %85 = vector.load %arg8[%c24, %c0_39] : memref<100x512xf32, #tpu.memory_space<vmem>>, vector<4x256xf32>
    tpu.vector_store %arg8[%c24, %c0_39], %84 {strides = array<i32>} : memref<100x512xf32, #tpu.memory_space<vmem>>, vector<4x256xf32>,
    %86 = vector.extract_strided_slice %83 {offsets = [4, 0], sizes = [4, 256], strides = [1, 1]} : vector<8x256xf32> to vector<4x256xf32>
    %c24_40 = arith.constant 24 : index
    %c256_41 = arith.constant 256 : index
    %87 = vector.load %arg8[%c24_40, %c256_41] : memref<100x512xf32, #tpu.memory_space<vmem>>, vector<4x256xf32>
    tpu.vector_store %arg8[%c24_40, %c256_41], %86 {strides = array<i32>} : memref<100x512xf32, #tpu.memory_space<vmem>>, vector<4x256xf32>,
    %c0_42 = arith.constant 0 : index
    %c112 = arith.constant 112 : index
    %88 = vector.load %arg7[%c0_42, %c112] : memref<8x512xf32, #tpu.memory_space<vmem>>, vector<8x256xf32>
    %89 = vector.extract_strided_slice %88 {offsets = [0, 0], sizes = [4, 256], strides = [1, 1]} : vector<8x256xf32> to vector<4x256xf32>
    %c28 = arith.constant 28 : index
    %c0_43 = arith.constant 0 : index
    %90 = vector.load %arg8[%c28, %c0_43] : memref<100x512xf32, #tpu.memory_space<vmem>>, vector<4x256xf32>
    tpu.vector_store %arg8[%c28, %c0_43], %89 {strides = array<i32>} : memref<100x512xf32, #tpu.memory_space<vmem>>, vector<4x256xf32>,
    %91 = vector.extract_strided_slice %88 {offsets = [4, 0], sizes = [4, 256], strides = [1, 1]} : vector<8x256xf32> to vector<4x256xf32>
    %c28_44 = arith.constant 28 : index
    %c256_45 = arith.constant 256 : index
    %92 = vector.load %arg8[%c28_44, %c256_45] : memref<100x512xf32, #tpu.memory_space<vmem>>, vector<4x256xf32>
    tpu.vector_store %arg8[%c28_44, %c256_45], %91 {strides = array<i32>} : memref<100x512xf32, #tpu.memory_space<vmem>>, vector<4x256xf32>,
    %c0_46 = arith.constant 0 : index
    %c113 = arith.constant 113 : index
    %93 = vector.load %arg7[%c0_46, %c113] : memref<8x512xf32, #tpu.memory_space<vmem>>, vector<8x256xf32>
    %cst_47 = arith.constant 0.000000e+00 : f32
    %94 = vector.broadcast %cst_47 : f32 to vector<8x256xf32>
    %95 = arith.select %35, %93, %94 : vector<8x256xi1>, vector<8x256xf32>
    %96 = vector.extract_strided_slice %95 {offsets = [0, 0], sizes = [4, 256], strides = [1, 1]} : vector<8x256xf32> to vector<4x256xf32>
    %c32 = arith.constant 32 : index
    %c0_48 = arith.constant 0 : index
    %97 = vector.load %arg8[%c32, %c0_48] : memref<100x512xf32, #tpu.memory_space<vmem>>, vector<4x256xf32>
    tpu.vector_store %arg8[%c32, %c0_48], %96 {strides = array<i32>} : memref<100x512xf32, #tpu.memory_space<vmem>>, vector<4x256xf32>,
    %98 = vector.extract_strided_slice %95 {offsets = [4, 0], sizes = [4, 256], strides = [1, 1]} : vector<8x256xf32> to vector<4x256xf32>
    %c32_49 = arith.constant 32 : index
    %c256_50 = arith.constant 256 : index
    %99 = vector.load %arg8[%c32_49, %c256_50] : memref<100x512xf32, #tpu.memory_space<vmem>>, vector<4x256xf32>
    tpu.vector_store %arg8[%c32_49, %c256_50], %98 {strides = array<i32>} : memref<100x512xf32, #tpu.memory_space<vmem>>, vector<4x256xf32>,
    %c0_51 = arith.constant 0 : index
    %c114 = arith.constant 114 : index
    %100 = vector.load %arg7[%c0_51, %c114] : memref<8x512xf32, #tpu.memory_space<vmem>>, vector<8x256xf32>
    %cst_52 = arith.constant 0.000000e+00 : f32
    %101 = vector.broadcast %cst_52 : f32 to vector<8x256xf32>
    %102 = arith.select %40, %100, %101 : vector<8x256xi1>, vector<8x256xf32>
    %103 = vector.extract_strided_slice %102 {offsets = [0, 0], sizes = [4, 256], strides = [1, 1]} : vector<8x256xf32> to vector<4x256xf32>
    %c36 = arith.constant 36 : index
    %c0_53 = arith.constant 0 : index
    %104 = vector.load %arg8[%c36, %c0_53] : memref<100x512xf32, #tpu.memory_space<vmem>>, vector<4x256xf32>
    tpu.vector_store %arg8[%c36, %c0_53], %103 {strides = array<i32>} : memref<100x512xf32, #tpu.memory_space<vmem>>, vector<4x256xf32>,
    %105 = vector.extract_strided_slice %102 {offsets = [4, 0], sizes = [4, 256], strides = [1, 1]} : vector<8x256xf32> to vector<4x256xf32>
    %c36_54 = arith.constant 36 : index
    %c256_55 = arith.constant 256 : index
    %106 = vector.load %arg8[%c36_54, %c256_55] : memref<100x512xf32, #tpu.memory_space<vmem>>, vector<4x256xf32>
    tpu.vector_store %arg8[%c36_54, %c256_55], %105 {strides = array<i32>} : memref<100x512xf32, #tpu.memory_space<vmem>>, vector<4x256xf32>,
    %c0_56 = arith.constant 0 : index
    %c126 = arith.constant 126 : index
    %107 = vector.load %arg7[%c0_56, %c126] : memref<8x512xf32, #tpu.memory_space<vmem>>, vector<8x256xf32>
    %cst_57 = arith.constant 0.000000e+00 : f32
    %108 = vector.broadcast %cst_57 : f32 to vector<8x256xf32>
    %109 = arith.select %25, %107, %108 : vector<8x256xi1>, vector<8x256xf32>
    %110 = vector.extract_strided_slice %109 {offsets = [0, 0], sizes = [4, 256], strides = [1, 1]} : vector<8x256xf32> to vector<4x256xf32>
    %c40 = arith.constant 40 : index
    %c0_58 = arith.constant 0 : index
    %111 = vector.load %arg8[%c40, %c0_58] : memref<100x512xf32, #tpu.memory_space<vmem>>, vector<4x256xf32>
    tpu.vector_store %arg8[%c40, %c0_58], %110 {strides = array<i32>} : memref<100x512xf32, #tpu.memory_space<vmem>>, vector<4x256xf32>,
    %112 = vector.extract_strided_slice %109 {offsets = [4, 0], sizes = [4, 256], strides = [1, 1]} : vector<8x256xf32> to vector<4x256xf32>
    %c40_59 = arith.constant 40 : index
    %c256_60 = arith.constant 256 : index
    %113 = vector.load %arg8[%c40_59, %c256_60] : memref<100x512xf32, #tpu.memory_space<vmem>>, vector<4x256xf32>
    tpu.vector_store %arg8[%c40_59, %c256_60], %112 {strides = array<i32>} : memref<100x512xf32, #tpu.memory_space<vmem>>, vector<4x256xf32>,
    %c0_61 = arith.constant 0 : index
    %c127 = arith.constant 127 : index
    %114 = vector.load %arg7[%c0_61, %c127] : memref<8x512xf32, #tpu.memory_space<vmem>>, vector<8x256xf32>
    %cst_62 = arith.constant 0.000000e+00 : f32
    %115 = vector.broadcast %cst_62 : f32 to vector<8x256xf32>
    %116 = arith.select %30, %114, %115 : vector<8x256xi1>, vector<8x256xf32>
    %117 = vector.extract_strided_slice %116 {offsets = [0, 0], sizes = [4, 256], strides = [1, 1]} : vector<8x256xf32> to vector<4x256xf32>
    %c44 = arith.constant 44 : index
    %c0_63 = arith.constant 0 : index
    %118 = vector.load %arg8[%c44, %c0_63] : memref<100x512xf32, #tpu.memory_space<vmem>>, vector<4x256xf32>
    tpu.vector_store %arg8[%c44, %c0_63], %117 {strides = array<i32>} : memref<100x512xf32, #tpu.memory_space<vmem>>, vector<4x256xf32>,
    %119 = vector.extract_strided_slice %116 {offsets = [4, 0], sizes = [4, 256], strides = [1, 1]} : vector<8x256xf32> to vector<4x256xf32>
    %c44_64 = arith.constant 44 : index
    %c256_65 = arith.constant 256 : index
    %120 = vector.load %arg8[%c44_64, %c256_65] : memref<100x512xf32, #tpu.memory_space<vmem>>, vector<4x256xf32>
    tpu.vector_store %arg8[%c44_64, %c256_65], %119 {strides = array<i32>} : memref<100x512xf32, #tpu.memory_space<vmem>>, vector<4x256xf32>,
    %c0_66 = arith.constant 0 : index
    %c128_67 = arith.constant 128 : index
    %121 = vector.load %arg7[%c0_66, %c128_67] : memref<8x512xf32, #tpu.memory_space<vmem>>, vector<8x256xf32>
    %122 = vector.extract_strided_slice %121 {offsets = [0, 0], sizes = [4, 256], strides = [1, 1]} : vector<8x256xf32> to vector<4x256xf32>
    %c48 = arith.constant 48 : index
    %c0_68 = arith.constant 0 : index
    %123 = vector.load %arg8[%c48, %c0_68] : memref<100x512xf32, #tpu.memory_space<vmem>>, vector<4x256xf32>
    tpu.vector_store %arg8[%c48, %c0_68], %122 {strides = array<i32>} : memref<100x512xf32, #tpu.memory_space<vmem>>, vector<4x256xf32>,
    %124 = vector.extract_strided_slice %121 {offsets = [4, 0], sizes = [4, 256], strides = [1, 1]} : vector<8x256xf32> to vector<4x256xf32>
    %c48_69 = arith.constant 48 : index
    %c256_70 = arith.constant 256 : index
    %125 = vector.load %arg8[%c48_69, %c256_70] : memref<100x512xf32, #tpu.memory_space<vmem>>, vector<4x256xf32>
    tpu.vector_store %arg8[%c48_69, %c256_70], %124 {strides = array<i32>} : memref<100x512xf32, #tpu.memory_space<vmem>>, vector<4x256xf32>,
    %c0_71 = arith.constant 0 : index
    %c129 = arith.constant 129 : index
    %126 = vector.load %arg7[%c0_71, %c129] : memref<8x512xf32, #tpu.memory_space<vmem>>, vector<8x256xf32>
    %cst_72 = arith.constant 0.000000e+00 : f32
    %127 = vector.broadcast %cst_72 : f32 to vector<8x256xf32>
    %128 = arith.select %35, %126, %127 : vector<8x256xi1>, vector<8x256xf32>
    %129 = vector.extract_strided_slice %128 {offsets = [0, 0], sizes = [4, 256], strides = [1, 1]} : vector<8x256xf32> to vector<4x256xf32>
    %c52 = arith.constant 52 : index
    %c0_73 = arith.constant 0 : index
    %130 = vector.load %arg8[%c52, %c0_73] : memref<100x512xf32, #tpu.memory_space<vmem>>, vector<4x256xf32>
    tpu.vector_store %arg8[%c52, %c0_73], %129 {strides = array<i32>} : memref<100x512xf32, #tpu.memory_space<vmem>>, vector<4x256xf32>,
    %131 = vector.extract_strided_slice %128 {offsets = [4, 0], sizes = [4, 256], strides = [1, 1]} : vector<8x256xf32> to vector<4x256xf32>
    %c52_74 = arith.constant 52 : index
    %c256_75 = arith.constant 256 : index
    %132 = vector.load %arg8[%c52_74, %c256_75] : memref<100x512xf32, #tpu.memory_space<vmem>>, vector<4x256xf32>
    tpu.vector_store %arg8[%c52_74, %c256_75], %131 {strides = array<i32>} : memref<100x512xf32, #tpu.memory_space<vmem>>, vector<4x256xf32>,
    %c0_76 = arith.constant 0 : index
    %c130 = arith.constant 130 : index
    %133 = vector.load %arg7[%c0_76, %c130] : memref<8x512xf32, #tpu.memory_space<vmem>>, vector<8x256xf32>
    %cst_77 = arith.constant 0.000000e+00 : f32
    %134 = vector.broadcast %cst_77 : f32 to vector<8x256xf32>
    %135 = arith.select %40, %133, %134 : vector<8x256xi1>, vector<8x256xf32>
    %136 = vector.extract_strided_slice %135 {offsets = [0, 0], sizes = [4, 256], strides = [1, 1]} : vector<8x256xf32> to vector<4x256xf32>
    %c56 = arith.constant 56 : index
    %c0_78 = arith.constant 0 : index
    %137 = vector.load %arg8[%c56, %c0_78] : memref<100x512xf32, #tpu.memory_space<vmem>>, vector<4x256xf32>
    tpu.vector_store %arg8[%c56, %c0_78], %136 {strides = array<i32>} : memref<100x512xf32, #tpu.memory_space<vmem>>, vector<4x256xf32>,
    %138 = vector.extract_strided_slice %135 {offsets = [4, 0], sizes = [4, 256], strides = [1, 1]} : vector<8x256xf32> to vector<4x256xf32>
    %c56_79 = arith.constant 56 : index
    %c256_80 = arith.constant 256 : index
    %139 = vector.load %arg8[%c56_79, %c256_80] : memref<100x512xf32, #tpu.memory_space<vmem>>, vector<4x256xf32>
    tpu.vector_store %arg8[%c56_79, %c256_80], %138 {strides = array<i32>} : memref<100x512xf32, #tpu.memory_space<vmem>>, vector<4x256xf32>,
    %c0_81 = arith.constant 0 : index
    %c142 = arith.constant 142 : index
    %140 = vector.load %arg7[%c0_81, %c142] : memref<8x512xf32, #tpu.memory_space<vmem>>, vector<8x256xf32>
    %cst_82 = arith.constant 0.000000e+00 : f32
    %141 = vector.broadcast %cst_82 : f32 to vector<8x256xf32>
    %142 = arith.select %25, %140, %141 : vector<8x256xi1>, vector<8x256xf32>
    %143 = vector.extract_strided_slice %142 {offsets = [0, 0], sizes = [4, 256], strides = [1, 1]} : vector<8x256xf32> to vector<4x256xf32>
    %c60 = arith.constant 60 : index
    %c0_83 = arith.constant 0 : index
    %144 = vector.load %arg8[%c60, %c0_83] : memref<100x512xf32, #tpu.memory_space<vmem>>, vector<4x256xf32>
    tpu.vector_store %arg8[%c60, %c0_83], %143 {strides = array<i32>} : memref<100x512xf32, #tpu.memory_space<vmem>>, vector<4x256xf32>,
    %145 = vector.extract_strided_slice %142 {offsets = [4, 0], sizes = [4, 256], strides = [1, 1]} : vector<8x256xf32> to vector<4x256xf32>
    %c60_84 = arith.constant 60 : index
    %c256_85 = arith.constant 256 : index
    %146 = vector.load %arg8[%c60_84, %c256_85] : memref<100x512xf32, #tpu.memory_space<vmem>>, vector<4x256xf32>
    tpu.vector_store %arg8[%c60_84, %c256_85], %145 {strides = array<i32>} : memref<100x512xf32, #tpu.memory_space<vmem>>, vector<4x256xf32>,
    %c0_86 = arith.constant 0 : index
    %c143 = arith.constant 143 : index
    %147 = vector.load %arg7[%c0_86, %c143] : memref<8x512xf32, #tpu.memory_space<vmem>>, vector<8x256xf32>
    %cst_87 = arith.constant 0.000000e+00 : f32
    %148 = vector.broadcast %cst_87 : f32 to vector<8x256xf32>
    %149 = arith.select %30, %147, %148 : vector<8x256xi1>, vector<8x256xf32>
    %150 = vector.extract_strided_slice %149 {offsets = [0, 0], sizes = [4, 256], strides = [1, 1]} : vector<8x256xf32> to vector<4x256xf32>
    %c64 = arith.constant 64 : index
    %c0_88 = arith.constant 0 : index
    %151 = vector.load %arg8[%c64, %c0_88] : memref<100x512xf32, #tpu.memory_space<vmem>>, vector<4x256xf32>
    tpu.vector_store %arg8[%c64, %c0_88], %150 {strides = array<i32>} : memref<100x512xf32, #tpu.memory_space<vmem>>, vector<4x256xf32>,
    %152 = vector.extract_strided_slice %149 {offsets = [4, 0], sizes = [4, 256], strides = [1, 1]} : vector<8x256xf32> to vector<4x256xf32>
    %c64_89 = arith.constant 64 : index
    %c256_90 = arith.constant 256 : index
    %153 = vector.load %arg8[%c64_89, %c256_90] : memref<100x512xf32, #tpu.memory_space<vmem>>, vector<4x256xf32>
    tpu.vector_store %arg8[%c64_89, %c256_90], %152 {strides = array<i32>} : memref<100x512xf32, #tpu.memory_space<vmem>>, vector<4x256xf32>,
    %c0_91 = arith.constant 0 : index
    %c144 = arith.constant 144 : index
    %154 = vector.load %arg7[%c0_91, %c144] : memref<8x512xf32, #tpu.memory_space<vmem>>, vector<8x256xf32>
    %155 = vector.extract_strided_slice %154 {offsets = [0, 0], sizes = [4, 256], strides = [1, 1]} : vector<8x256xf32> to vector<4x256xf32>
    %c68 = arith.constant 68 : index
    %c0_92 = arith.constant 0 : index
    %156 = vector.load %arg8[%c68, %c0_92] : memref<100x512xf32, #tpu.memory_space<vmem>>, vector<4x256xf32>
    tpu.vector_store %arg8[%c68, %c0_92], %155 {strides = array<i32>} : memref<100x512xf32, #tpu.memory_space<vmem>>, vector<4x256xf32>,
    %157 = vector.extract_strided_slice %154 {offsets = [4, 0], sizes = [4, 256], strides = [1, 1]} : vector<8x256xf32> to vector<4x256xf32>
    %c68_93 = arith.constant 68 : index
    %c256_94 = arith.constant 256 : index
    %158 = vector.load %arg8[%c68_93, %c256_94] : memref<100x512xf32, #tpu.memory_space<vmem>>, vector<4x256xf32>
    tpu.vector_store %arg8[%c68_93, %c256_94], %157 {strides = array<i32>} : memref<100x512xf32, #tpu.memory_space<vmem>>, vector<4x256xf32>,
    %c0_95 = arith.constant 0 : index
    %c145 = arith.constant 145 : index
    %159 = vector.load %arg7[%c0_95, %c145] : memref<8x512xf32, #tpu.memory_space<vmem>>, vector<8x256xf32>
    %cst_96 = arith.constant 0.000000e+00 : f32
    %160 = vector.broadcast %cst_96 : f32 to vector<8x256xf32>
    %161 = arith.select %35, %159, %160 : vector<8x256xi1>, vector<8x256xf32>
    %162 = vector.extract_strided_slice %161 {offsets = [0, 0], sizes = [4, 256], strides = [1, 1]} : vector<8x256xf32> to vector<4x256xf32>
    %c72 = arith.constant 72 : index
    %c0_97 = arith.constant 0 : index
    %163 = vector.load %arg8[%c72, %c0_97] : memref<100x512xf32, #tpu.memory_space<vmem>>, vector<4x256xf32>
    tpu.vector_store %arg8[%c72, %c0_97], %162 {strides = array<i32>} : memref<100x512xf32, #tpu.memory_space<vmem>>, vector<4x256xf32>,
    %164 = vector.extract_strided_slice %161 {offsets = [4, 0], sizes = [4, 256], strides = [1, 1]} : vector<8x256xf32> to vector<4x256xf32>
    %c72_98 = arith.constant 72 : index
    %c256_99 = arith.constant 256 : index
    %165 = vector.load %arg8[%c72_98, %c256_99] : memref<100x512xf32, #tpu.memory_space<vmem>>, vector<4x256xf32>
    tpu.vector_store %arg8[%c72_98, %c256_99], %164 {strides = array<i32>} : memref<100x512xf32, #tpu.memory_space<vmem>>, vector<4x256xf32>,
    %c0_100 = arith.constant 0 : index
    %c146 = arith.constant 146 : index
    %166 = vector.load %arg7[%c0_100, %c146] : memref<8x512xf32, #tpu.memory_space<vmem>>, vector<8x256xf32>
    %cst_101 = arith.constant 0.000000e+00 : f32
    %167 = vector.broadcast %cst_101 : f32 to vector<8x256xf32>
    %168 = arith.select %40, %166, %167 : vector<8x256xi1>, vector<8x256xf32>
    %169 = vector.extract_strided_slice %168 {offsets = [0, 0], sizes = [4, 256], strides = [1, 1]} : vector<8x256xf32> to vector<4x256xf32>
    %c76 = arith.constant 76 : index
    %c0_102 = arith.constant 0 : index
    %170 = vector.load %arg8[%c76, %c0_102] : memref<100x512xf32, #tpu.memory_space<vmem>>, vector<4x256xf32>
    tpu.vector_store %arg8[%c76, %c0_102], %169 {strides = array<i32>} : memref<100x512xf32, #tpu.memory_space<vmem>>, vector<4x256xf32>,
    %171 = vector.extract_strided_slice %168 {offsets = [4, 0], sizes = [4, 256], strides = [1, 1]} : vector<8x256xf32> to vector<4x256xf32>
    %c76_103 = arith.constant 76 : index
    %c256_104 = arith.constant 256 : index
    %172 = vector.load %arg8[%c76_103, %c256_104] : memref<100x512xf32, #tpu.memory_space<vmem>>, vector<4x256xf32>
    tpu.vector_store %arg8[%c76_103, %c256_104], %171 {strides = array<i32>} : memref<100x512xf32, #tpu.memory_space<vmem>>, vector<4x256xf32>,
    %c0_105 = arith.constant 0 : index
    %c158 = arith.constant 158 : index
    %173 = vector.load %arg7[%c0_105, %c158] : memref<8x512xf32, #tpu.memory_space<vmem>>, vector<8x256xf32>
    %cst_106 = arith.constant 0.000000e+00 : f32
    %174 = vector.broadcast %cst_106 : f32 to vector<8x256xf32>
    %175 = arith.select %25, %173, %174 : vector<8x256xi1>, vector<8x256xf32>
    %176 = vector.extract_strided_slice %175 {offsets = [0, 0], sizes = [4, 256], strides = [1, 1]} : vector<8x256xf32> to vector<4x256xf32>
    %c80 = arith.constant 80 : index
    %c0_107 = arith.constant 0 : index
    %177 = vector.load %arg8[%c80, %c0_107] : memref<100x512xf32, #tpu.memory_space<vmem>>, vector<4x256xf32>
    tpu.vector_store %arg8[%c80, %c0_107], %176 {strides = array<i32>} : memref<100x512xf32, #tpu.memory_space<vmem>>, vector<4x256xf32>,
    %178 = vector.extract_strided_slice %175 {offsets = [4, 0], sizes = [4, 256], strides = [1, 1]} : vector<8x256xf32> to vector<4x256xf32>
    %c80_108 = arith.constant 80 : index
    %c256_109 = arith.constant 256 : index
    %179 = vector.load %arg8[%c80_108, %c256_109] : memref<100x512xf32, #tpu.memory_space<vmem>>, vector<4x256xf32>
    tpu.vector_store %arg8[%c80_108, %c256_109], %178 {strides = array<i32>} : memref<100x512xf32, #tpu.memory_space<vmem>>, vector<4x256xf32>,
    %c0_110 = arith.constant 0 : index
    %c159 = arith.constant 159 : index
    %180 = vector.load %arg7[%c0_110, %c159] : memref<8x512xf32, #tpu.memory_space<vmem>>, vector<8x256xf32>
    %cst_111 = arith.constant 0.000000e+00 : f32
    %181 = vector.broadcast %cst_111 : f32 to vector<8x256xf32>
    %182 = arith.select %30, %180, %181 : vector<8x256xi1>, vector<8x256xf32>
    %183 = vector.extract_strided_slice %182 {offsets = [0, 0], sizes = [4, 256], strides = [1, 1]} : vector<8x256xf32> to vector<4x256xf32>
    %c84 = arith.constant 84 : index
    %c0_112 = arith.constant 0 : index
    %184 = vector.load %arg8[%c84, %c0_112] : memref<100x512xf32, #tpu.memory_space<vmem>>, vector<4x256xf32>
    tpu.vector_store %arg8[%c84, %c0_112], %183 {strides = array<i32>} : memref<100x512xf32, #tpu.memory_space<vmem>>, vector<4x256xf32>,
    %185 = vector.extract_strided_slice %182 {offsets = [4, 0], sizes = [4, 256], strides = [1, 1]} : vector<8x256xf32> to vector<4x256xf32>
    %c84_113 = arith.constant 84 : index
    %c256_114 = arith.constant 256 : index
    %186 = vector.load %arg8[%c84_113, %c256_114] : memref<100x512xf32, #tpu.memory_space<vmem>>, vector<4x256xf32>
    tpu.vector_store %arg8[%c84_113, %c256_114], %185 {strides = array<i32>} : memref<100x512xf32, #tpu.memory_space<vmem>>, vector<4x256xf32>,
    %c0_115 = arith.constant 0 : index
    %c160 = arith.constant 160 : index
    %187 = vector.load %arg7[%c0_115, %c160] : memref<8x512xf32, #tpu.memory_space<vmem>>, vector<8x256xf32>
    %188 = vector.extract_strided_slice %187 {offsets = [0, 0], sizes = [4, 256], strides = [1, 1]} : vector<8x256xf32> to vector<4x256xf32>
    %c88 = arith.constant 88 : index
    %c0_116 = arith.constant 0 : index
    %189 = vector.load %arg8[%c88, %c0_116] : memref<100x512xf32, #tpu.memory_space<vmem>>, vector<4x256xf32>
    tpu.vector_store %arg8[%c88, %c0_116], %188 {strides = array<i32>} : memref<100x512xf32, #tpu.memory_space<vmem>>, vector<4x256xf32>,
    %190 = vector.extract_strided_slice %187 {offsets = [4, 0], sizes = [4, 256], strides = [1, 1]} : vector<8x256xf32> to vector<4x256xf32>
    %c88_117 = arith.constant 88 : index
    %c256_118 = arith.constant 256 : index
    %191 = vector.load %arg8[%c88_117, %c256_118] : memref<100x512xf32, #tpu.memory_space<vmem>>, vector<4x256xf32>
    tpu.vector_store %arg8[%c88_117, %c256_118], %190 {strides = array<i32>} : memref<100x512xf32, #tpu.memory_space<vmem>>, vector<4x256xf32>,
    %c0_119 = arith.constant 0 : index
    %c161 = arith.constant 161 : index
    %192 = vector.load %arg7[%c0_119, %c161] : memref<8x512xf32, #tpu.memory_space<vmem>>, vector<8x256xf32>
    %cst_120 = arith.constant 0.000000e+00 : f32
    %193 = vector.broadcast %cst_120 : f32 to vector<8x256xf32>
    %194 = arith.select %35, %192, %193 : vector<8x256xi1>, vector<8x256xf32>
    %195 = vector.extract_strided_slice %194 {offsets = [0, 0], sizes = [4, 256], strides = [1, 1]} : vector<8x256xf32> to vector<4x256xf32>
    %c92 = arith.constant 92 : index
    %c0_121 = arith.constant 0 : index
    %196 = vector.load %arg8[%c92, %c0_121] : memref<100x512xf32, #tpu.memory_space<vmem>>, vector<4x256xf32>
    tpu.vector_store %arg8[%c92, %c0_121], %195 {strides = array<i32>} : memref<100x512xf32, #tpu.memory_space<vmem>>, vector<4x256xf32>,
    %197 = vector.extract_strided_slice %194 {offsets = [4, 0], sizes = [4, 256], strides = [1, 1]} : vector<8x256xf32> to vector<4x256xf32>
    %c92_122 = arith.constant 92 : index
    %c256_123 = arith.constant 256 : index
    %198 = vector.load %arg8[%c92_122, %c256_123] : memref<100x512xf32, #tpu.memory_space<vmem>>, vector<4x256xf32>
    tpu.vector_store %arg8[%c92_122, %c256_123], %197 {strides = array<i32>} : memref<100x512xf32, #tpu.memory_space<vmem>>, vector<4x256xf32>,
    %c0_124 = arith.constant 0 : index
    %c162 = arith.constant 162 : index
    %199 = vector.load %arg7[%c0_124, %c162] : memref<8x512xf32, #tpu.memory_space<vmem>>, vector<8x256xf32>
    %cst_125 = arith.constant 0.000000e+00 : f32
    %200 = vector.broadcast %cst_125 : f32 to vector<8x256xf32>
    %201 = arith.select %40, %199, %200 : vector<8x256xi1>, vector<8x256xf32>
    %202 = vector.extract_strided_slice %201 {offsets = [0, 0], sizes = [4, 256], strides = [1, 1]} : vector<8x256xf32> to vector<4x256xf32>
    %c96_126 = arith.constant 96 : index
    %c0_127 = arith.constant 0 : index
    %203 = vector.load %arg8[%c96_126, %c0_127] : memref<100x512xf32, #tpu.memory_space<vmem>>, vector<4x256xf32>
    tpu.vector_store %arg8[%c96_126, %c0_127], %202 {strides = array<i32>} : memref<100x512xf32, #tpu.memory_space<vmem>>, vector<4x256xf32>,
    %204 = vector.extract_strided_slice %201 {offsets = [4, 0], sizes = [4, 256], strides = [1, 1]} : vector<8x256xf32> to vector<4x256xf32>
    %c96_128 = arith.constant 96 : index
    %c256_129 = arith.constant 256 : index
    %205 = vector.load %arg8[%c96_128, %c256_129] : memref<100x512xf32, #tpu.memory_space<vmem>>, vector<4x256xf32>
    tpu.vector_store %arg8[%c96_128, %c256_129], %204 {strides = array<i32>} : memref<100x512xf32, #tpu.memory_space<vmem>>, vector<4x256xf32>,
    %c0_130 = arith.constant 0 : index
    %c0_131 = arith.constant 0 : index
    %206 = vector.load %arg2[%c0_130, %c0_131] : memref<8x100xf32, #tpu.memory_space<vmem>>, vector<8x100xf32>
    %c0_132 = arith.constant 0 : index
    %c0_133 = arith.constant 0 : index
    %207 = vector.load %arg8[%c0_132, %c0_133] : memref<100x512xf32, #tpu.memory_space<vmem>>, vector<100x512xf32>
    %cst_134 = arith.constant dense<0.000000e+00> : vector<8x512xf32>
    %208 = tpu.matmul %206, %207, %cst_134 {dimension_numbers = #tpu.dot_dimension_numbers<[1], [0], [0], [1], [0, 0, 1, 1], [], []>} : vector<8x100xf32>, vector<100x512xf32>, vector<8x512xf32> -> vector<8x512xf32>
    %c0_135 = arith.constant 0 : index
    %c0_136 = arith.constant 0 : index
    %209 = vector.load %arg3[%c0_135, %c0_136] : memref<8x1xf32, #tpu.memory_space<vmem>>, vector<8x1xf32>
    %210 = vector.broadcast %209 : vector<8x1xf32> to vector<8x512xf32>
    %211 = arith.addf %208, %210 : vector<8x512xf32>
    %cst_137 = arith.constant 0.000000e+00 : f32
    %212 = vector.broadcast %cst_137 : f32 to vector<8x512xf32>
    %213 = arith.maximumf %211, %212 : vector<8x512xf32>
    %cst_138 = arith.constant dense<0.000000e+00> : vector<8xf32>
    %214 = vector.multi_reduction <add>, %213, %cst_138 [1] : vector<8x512xf32> to vector<8xf32>
    %215 = vector.shape_cast %214 : vector<8xf32> to vector<8x1xf32>
    %cst_139 = arith.constant 0.001953125 : f32
    %216 = vector.broadcast %cst_139 : f32 to vector<8x1xf32>
    %217 = arith.mulf %215, %216 : vector<8x1xf32>
    %218 = vector.broadcast %217 : vector<8x1xf32> to vector<8x512xf32>
    %219 = arith.subf %213, %218 : vector<8x512xf32>
    %220 = arith.mulf %219, %219 : vector<8x512xf32>
    %cst_140 = arith.constant dense<0.000000e+00> : vector<8xf32>
    %221 = vector.multi_reduction <add>, %220, %cst_140 [1] : vector<8x512xf32> to vector<8xf32>
    %222 = vector.shape_cast %221 : vector<8xf32> to vector<8x1xf32>
    %cst_141 = arith.constant 0.001953125 : f32
    %223 = vector.broadcast %cst_141 : f32 to vector<8x1xf32>
    %224 = arith.mulf %222, %223 : vector<8x1xf32>
    %cst_142 = arith.constant 9.99999974E-6 : f32
    %225 = vector.broadcast %cst_142 : f32 to vector<8x1xf32>
    %226 = arith.addf %224, %225 : vector<8x1xf32>
    %227 = math.rsqrt %226 : vector<8x1xf32>
    %228 = vector.broadcast %227 : vector<8x1xf32> to vector<8x512xf32>
    %229 = arith.mulf %219, %228 : vector<8x512xf32>
    %c0_143 = arith.constant 0 : index
    %c0_144 = arith.constant 0 : index
    %230 = vector.load %arg4[%c0_143, %c0_144] : memref<8x1xf32, #tpu.memory_space<vmem>>, vector<8x1xf32>
    %231 = vector.broadcast %230 : vector<8x1xf32> to vector<8x512xf32>
    %232 = arith.mulf %229, %231 : vector<8x512xf32>
    %c0_145 = arith.constant 0 : index
    %c0_146 = arith.constant 0 : index
    %233 = vector.load %arg5[%c0_145, %c0_146] : memref<8x1xf32, #tpu.memory_space<vmem>>, vector<8x1xf32>
    %234 = vector.broadcast %233 : vector<8x1xf32> to vector<8x512xf32>
    %235 = arith.addf %232, %234 : vector<8x512xf32>
    %236 = vector.extract_strided_slice %235 {offsets = [0, 0], sizes = [8, 256], strides = [1, 1]} : vector<8x512xf32> to vector<8x256xf32>
    %c0_147 = arith.constant 0 : index
    %c0_148 = arith.constant 0 : index
    %c0_149 = arith.constant 0 : index
    %237 = vector.load %arg6[%c0_147, %c0_148, %c0_149] : memref<2x8x256xf32, #tpu.memory_space<vmem>>, vector<1x8x256xf32>
    %238 = vector.shape_cast %237 : vector<1x8x256xf32> to vector<8x256xf32>
    %239 = vector.shape_cast %236 : vector<8x256xf32> to vector<1x8x256xf32>
    tpu.vector_store %arg6[%c0_147, %c0_148, %c0_149], %239 {strides = array<i32>} : memref<2x8x256xf32, #tpu.memory_space<vmem>>, vector<1x8x256xf32>,
    %240 = vector.extract_strided_slice %235 {offsets = [0, 256], sizes = [8, 256], strides = [1, 1]} : vector<8x512xf32> to vector<8x256xf32>
    %c1 = arith.constant 1 : index
    %c0_150 = arith.constant 0 : index
    %c0_151 = arith.constant 0 : index
    %241 = vector.load %arg6[%c1, %c0_150, %c0_151] : memref<2x8x256xf32, #tpu.memory_space<vmem>>, vector<1x8x256xf32>
    %242 = vector.shape_cast %241 : vector<1x8x256xf32> to vector<8x256xf32>
    %243 = vector.shape_cast %240 : vector<8x256xf32> to vector<1x8x256xf32>
    tpu.vector_store %arg6[%c1, %c0_150, %c0_151], %243 {strides = array<i32>} : memref<2x8x256xf32, #tpu.memory_space<vmem>>, vector<1x8x256xf32>,
    return
  }
  func.func @transform_0(%arg0: i32) -> (i32, i32) {
    %c0_i32 = arith.constant 0 : i32
    %c0_i32_0 = arith.constant 0 : i32
    %c0_i32_1 = arith.constant 0 : i32
    return %c0_i32, %c0_i32_0 : i32, i32
  }
  func.func @transform_1(%arg0: i32) -> (i32, i32) {
    %c0_i32 = arith.constant 0 : i32
    %c0_i32_0 = arith.constant 0 : i32
    %c0_i32_1 = arith.constant 0 : i32
    return %c0_i32, %c0_i32_0 : i32, i32
  }
  func.func @transform_2(%arg0: i32) -> (i32, i32) {
    %c0_i32 = arith.constant 0 : i32
    %c0_i32_0 = arith.constant 0 : i32
    %c0_i32_1 = arith.constant 0 : i32
    return %c0_i32, %c0_i32_0 : i32, i32
  }
  func.func @transform_3(%arg0: i32) -> (i32, i32) {
    %c0_i32 = arith.constant 0 : i32
    %c0_i32_0 = arith.constant 0 : i32
    %c0_i32_1 = arith.constant 0 : i32
    return %c0_i32, %c0_i32_0 : i32, i32
  }
  func.func @transform_4(%arg0: i32) -> (i32, i32) {
    %c0_i32 = arith.constant 0 : i32
    %c0_i32_0 = arith.constant 0 : i32
    %c0_i32_1 = arith.constant 0 : i32
    return %c0_i32, %c0_i32_0 : i32, i32
  }
  func.func @transform_5(%arg0: i32) -> (i32, i32, i32) {
    %c0_i32 = arith.constant 0 : i32
    %c0_i32_0 = arith.constant 0 : i32
    %c0_i32_1 = arith.constant 0 : i32
    %c0_i32_2 = arith.constant 0 : i32
    return %c0_i32, %c0_i32_0, %c0_i32_1 : i32, i32, i32
  }
}

</mosaic_0001>

<llo_original>
// kernel: conv2d_block_forward.1
$region0: #{conv2d_block_forward.1}
  #allocation0 [shape = 'u32[]', space=smem, size = 0x4, offset = 0x4, fixed_abs, tag = 'smem constant byte address 0x4 - core index']
  #allocation1 [shape = 'u32[72,128]{1,0:T(1,128)}', space=vmem, size = 0x9000, scoped, tag = 'internal scratch']
  #allocation2 [shape = 'f32[8,512]{1,0:T(8,128)}', space=vmem, size = 0x4000, scoped, tag = 'scratch operand']
  #allocation3 [shape = 'f32[100,512]{1,0:T(8,128)}', space=vmem, size = 0x34000, scoped, tag = 'scratch operand']
  %s0 = inlined_call_operand.vmem [shape: f32[8,256], index: 0, kind: input, shape index: {}]
  %s1 = inlined_call_operand.vmem [shape: f32[8,100], index: 1, kind: input, shape index: {}]
  %s2 = inlined_call_operand.vmem [shape: f32[8,1], index: 2, kind: input, shape index: {}]
  %s3 = inlined_call_operand.vmem [shape: f32[8,1], index: 3, kind: input, shape index: {}]
  %s4 = inlined_call_operand.vmem [shape: f32[8,1], index: 4, kind: input, shape index: {}]
  %s5 = inlined_call_operand.vmem [shape: f32[2,8,256], index: 5, kind: output, shape index: {}]
  %s6 = sld [smem:[#allocation0]]
  $region30: #{conv2d_block_forward.1} parent=0
    _
  %s8 = ssub.s32 1, %s6
  %s9 = scalar_select 0, %s8, %s6
  // Predicated region
  $region2: #{conv2d_block_forward.1} parent=0 // pred_check
    _
  $region3: #{conv2d_block_forward.1} parent=0 // pred_check_branch
    %11 = sbr.rel (0) target = $region5
  $region4: #{conv2d_block_forward.1} parent=0 // pred_region
    _
  $region5: #{conv2d_block_forward.1} parent=0 // pred_fallthru
    _
  // Predicated region
  $region6: #{conv2d_block_forward.1} parent=0 // pred_check
    _
  $region7: #{conv2d_block_forward.1} parent=0 // pred_check_branch
    %13 = sbr.rel (0) target = $region9
  $region8: #{conv2d_block_forward.1} parent=0 // pred_region
    _
  $region9: #{conv2d_block_forward.1} parent=0 // pred_fallthru
    _
  // Predicated region
  $region10: #{conv2d_block_forward.1} parent=0 // pred_check
    _
  $region11: #{conv2d_block_forward.1} parent=0 // pred_check_branch
    %15 = sbr.rel (0) target = $region13
  $region12: #{conv2d_block_forward.1} parent=0 // pred_region
    _
  $region13: #{conv2d_block_forward.1} parent=0 // pred_fallthru
    _
  // Predicated region
  $region14: #{conv2d_block_forward.1} parent=0 // pred_check
    _
  $region15: #{conv2d_block_forward.1} parent=0 // pred_check_branch
    %17 = sbr.rel (0) target = $region17
  $region16: #{conv2d_block_forward.1} parent=0 // pred_region
    _
  $region17: #{conv2d_block_forward.1} parent=0 // pred_fallthru
    _
  // Predicated region
  $region18: #{conv2d_block_forward.1} parent=0 // pred_check
    _
  $region19: #{conv2d_block_forward.1} parent=0 // pred_check_branch
    %19 = sbr.rel (0) target = $region21
  $region20: #{conv2d_block_forward.1} parent=0 // pred_region
    _
  $region21: #{conv2d_block_forward.1} parent=0 // pred_fallthru
    _
  %20 = vst [vmem:[#allocation2] sm:$0xff] 0.0
  %21 = vst [vmem:[#allocation2 + $0x8] sm:$0xff] 0.0
  %22 = vst [vmem:[#allocation2 + $0x10] sm:$0xff] 0.0
  %23 = vst [vmem:[#allocation2 + $0x18] sm:$0xff] 0.0
  %v24 = vld [vmem:[%s0] sm:$0xff]
  %v25 = vld [vmem:[%s0 + $0x8] sm:$0xff]
  %26 = vst [vmem:[#allocation2 + $0x8] sm:$0xff] %v24
  %27 = vst [vmem:[#allocation2 + $0x10] sm:$0xff] %v25
  %v28 = vlaneseq
  %v29 = vand.u32 %v28, 127
  %v30 = vadd.s32 %v29, 128
  %vm31 = vcmp.lt.s32.totalorder %v29, 0
  %v32 = vsub.s32 0, %v29
  %v33 = vsel %vm31, %v32, %v29
  %v34 = vshrl.u32 %v33, 4
  %v35 = vand.u32 %v33, 15
  %v36 = vsub.s32 0, %v35
  %v37 = vsel %vm31, %v36, %v35
  %vm38 = vcmp.lt.s32.totalorder %v30, 0
  %v39 = vsub.s32 0, %v30
  %v40 = vsel %vm38, %v39, %v30
  %v41 = vshrl.u32 %v40, 4
  %v42 = vand.u32 %v40, 15
  %v43 = vsub.s32 0, %v42
  %v44 = vsel %vm38, %v43, %v42
  %vm45 = vcmp.ne.s32.totalorder %v37, 0
  %vm46 = vcmp.ne.s32.totalorder %v44, 0
  %vm47 = vcmp.lt.s32.totalorder %v37, 0
  %vm48 = vcmp.lt.s32.totalorder %v44, 0
  %vm49 = vmand %vm47, %vm45
  %vm50 = vmand %vm48, %vm46
  %v51 = vadd.s32 %v37, 16
  %v52 = vadd.s32 %v44, 16
  %v53 = vsel %vm49, %v51, %v37
  %v54 = vsel %vm50, %v52, %v44
  %vm55 = vcmp.ge.s32.totalorder %v53, 2
  %vm56 = vcmp.ge.s32.totalorder %v54, 2
  %vm57 = vcmp.lt.s32.totalorder %v53, 18
  %vm58 = vcmp.lt.s32.totalorder %v54, 18
  %vm59 = vmand %vm55, %vm57
  %vm60 = vmand %vm56, %vm58
  %vm61 = vcmp.ge.s32.totalorder %v53, 1
  %vm62 = vcmp.ge.s32.totalorder %v54, 1
  %vm63 = vcmp.lt.s32.totalorder %v53, 17
  %vm64 = vcmp.lt.s32.totalorder %v54, 17
  %vm65 = vmand %vm61, %vm63
  %vm66 = vmand %vm62, %vm64
  %vm67 = vcmp.ge.s32.totalorder %v53, 4294967295
  %vm68 = vcmp.ge.s32.totalorder %v54, 4294967295
  %vm69 = vcmp.lt.s32.totalorder %v53, 15
  %vm70 = vcmp.lt.s32.totalorder %v54, 15
  %vm71 = vmand %vm67, %vm69
  %vm72 = vmand %vm68, %vm70
  %vm73 = vcmp.ge.s32.totalorder %v53, 4294967294
  %vm74 = vcmp.ge.s32.totalorder %v54, 4294967294
  %vm75 = vcmp.lt.s32.totalorder %v53, 14
  %vm76 = vcmp.lt.s32.totalorder %v54, 14
  %vm77 = vmand %vm73, %vm75
  %vm78 = vmand %vm74, %vm76
  %v79 = vld [vmem:[#allocation2] sm:$0xff]
  %v80 = vld [vmem:[#allocation2 + $0x8] sm:$0xff]
  %v81 = vld [vmem:[#allocation2 + $0x10] sm:$0xff]
  %85 = vrot.lane.b32.xlu0 %v79, 34
  %v86 = vpop.permute.xlu0 %85
  %87 = vrot.lane.b32.xlu0 %v80, 34
  %v88 = vpop.permute.xlu0 %87
  %89 = vrot.lane.b32.xlu0 %v81, 34
  %v90 = vpop.permute.xlu0 %89
  %vm91 = vcmask 277504
  %v92 = vsel %vm91, %v86, %v88
  %v93 = vsel %vm91, %v88, %v90
  %v96 = vsel %vm59, %v92, 0.0
  %v97 = vsel %vm60, %v93, 0.0
  %98 = vst [vmem:[#allocation3] sm:$0xf] %v96
  %99 = vst [vmem:[#allocation3 + $0x8] sm:$0xf] %v97
  %v102 = vrot.slane %v96, 4
  %v103 = vrot.slane %v97, 4
  %106 = vst [vmem:[#allocation3 + $0x10] sm:$0xf] %v102
  %107 = vst [vmem:[#allocation3 + $0x18] sm:$0xf] %v103
  %v108 = vld [vmem:[#allocation2] sm:$0xff]
  %v109 = vld [vmem:[#allocation2 + $0x8] sm:$0xff]
  %v110 = vld [vmem:[#allocation2 + $0x10] sm:$0xff]
  %114 = vrot.lane.b32.xlu0 %v108, 33
  %v115 = vpop.permute.xlu0 %114
  %116 = vrot.lane.b32.xlu0 %v109, 33
  %v117 = vpop.permute.xlu0 %116
  %118 = vrot.lane.b32.xlu0 %v110, 33
  %v119 = vpop.permute.xlu0 %118
  %vm120 = vcmask 269312
  %v121 = vsel %vm120, %v115, %v117
  %v122 = vsel %vm120, %v117, %v119
  %v125 = vsel %vm65, %v121, 0.0
  %v126 = vsel %vm66, %v122, 0.0
  %v129 = vrot.slane %v125, 4
  %v130 = vrot.slane %v126, 4
  %133 = vst [vmem:[#allocation3] sm:$0xf0] %v129
  %134 = vst [vmem:[#allocation3 + $0x8] sm:$0xf0] %v130
  %135 = vst [vmem:[#allocation3 + $0x10] sm:$0xf0] %v125
  %136 = vst [vmem:[#allocation3 + $0x18] sm:$0xf0] %v126
  %v137 = vld [vmem:[#allocation2] sm:$0xff]
  %v138 = vld [vmem:[#allocation2 + $0x8] sm:$0xff]
  %v139 = vld [vmem:[#allocation2 + $0x10] sm:$0xff]
  %143 = vrot.lane.b32.xlu0 %v137, 32
  %v144 = vpop.permute.xlu0 %143
  %145 = vrot.lane.b32.xlu0 %v138, 32
  %v146 = vpop.permute.xlu0 %145
  %147 = vrot.lane.b32.xlu0 %v139, 32
  %v148 = vpop.permute.xlu0 %147
  %vm149 = vcmask 261120
  %v150 = vsel %vm149, %v144, %v146
  %v151 = vsel %vm149, %v146, %v148
  %154 = vst [vmem:[#allocation3 + $0x20] sm:$0xf] %v150
  %155 = vst [vmem:[#allocation3 + $0x28] sm:$0xf] %v151
  %v156 = vrot.slane %v137, 4
  %v157 = vrot.slane %v138, 4
  %v158 = vrot.slane %v139, 4
  %159 = vrot.lane.b32.xlu0 %v156, 32
  %v160 = vpop.permute.xlu0 %159
  %161 = vrot.lane.b32.xlu0 %v157, 32
  %v162 = vpop.permute.xlu0 %161
  %163 = vrot.lane.b32.xlu0 %v158, 32
  %v164 = vpop.permute.xlu0 %163
  %v165 = vsel %vm149, %v160, %v162
  %v166 = vsel %vm149, %v162, %v164
  %169 = vst [vmem:[#allocation3 + $0x30] sm:$0xf] %v165
  %170 = vst [vmem:[#allocation3 + $0x38] sm:$0xf] %v166
  %v171 = vld [vmem:[#allocation2] sm:$0xff]
  %v172 = vld [vmem:[#allocation2 + $0x8] sm:$0xff]
  %v173 = vld [vmem:[#allocation2 + $0x10] sm:$0xff]
  %177 = vrot.lane.b32.xlu0 %v171, 31
  %v178 = vpop.permute.xlu0 %177
  %179 = vrot.lane.b32.xlu0 %v172, 31
  %v180 = vpop.permute.xlu0 %179
  %181 = vrot.lane.b32.xlu0 %v173, 31
  %v182 = vpop.permute.xlu0 %181
  %vm183 = vcmask 252928
  %v184 = vsel %vm183, %v178, %v180
  %v185 = vsel %vm183, %v180, %v182
  %v188 = vsel %vm71, %v184, 0.0
  %v189 = vsel %vm72, %v185, 0.0
  %v192 = vrot.slane %v188, 4
  %v193 = vrot.slane %v189, 4
  %196 = vst [vmem:[#allocation3 + $0x20] sm:$0xf0] %v192
  %197 = vst [vmem:[#allocation3 + $0x28] sm:$0xf0] %v193
  %198 = vst [vmem:[#allocation3 + $0x30] sm:$0xf0] %v188
  %199 = vst [vmem:[#allocation3 + $0x38] sm:$0xf0] %v189
  %v200 = vld [vmem:[#allocation2] sm:$0xff]
  %v201 = vld [vmem:[#allocation2 + $0x8] sm:$0xff]
  %v202 = vld [vmem:[#allocation2 + $0x10] sm:$0xff]
  %206 = vrot.lane.b32.xlu0 %v200, 30
  %v207 = vpop.permute.xlu0 %206
  %208 = vrot.lane.b32.xlu0 %v201, 30
  %v209 = vpop.permute.xlu0 %208
  %210 = vrot.lane.b32.xlu0 %v202, 30
  %v211 = vpop.permute.xlu0 %210
  %vm212 = vcmask 244736
  %v213 = vsel %vm212, %v207, %v209
  %v214 = vsel %vm212, %v209, %v211
  %v217 = vsel %vm77, %v213, 0.0
  %v218 = vsel %vm78, %v214, 0.0
  %219 = vst [vmem:[#allocation3 + $0x40] sm:$0xf] %v217
  %220 = vst [vmem:[#allocation3 + $0x48] sm:$0xf] %v218
  %v223 = vrot.slane %v217, 4
  %v224 = vrot.slane %v218, 4
  %227 = vst [vmem:[#allocation3 + $0x50] sm:$0xf] %v223
  %228 = vst [vmem:[#allocation3 + $0x58] sm:$0xf] %v224
  %v229 = vld [vmem:[#allocation2] sm:$0xff]
  %v230 = vld [vmem:[#allocation2 + $0x8] sm:$0xff]
  %v231 = vld [vmem:[#allocation2 + $0x10] sm:$0xff]
  %235 = vrot.lane.b32.xlu0 %v229, 18
  %v236 = vpop.permute.xlu0 %235
  %237 = vrot.lane.b32.xlu0 %v230, 18
  %v238 = vpop.permute.xlu0 %237
  %239 = vrot.lane.b32.xlu0 %v231, 18
  %v240 = vpop.permute.xlu0 %239
  %vm241 = vcmask 146432
  %v242 = vsel %vm241, %v236, %v238
  %v243 = vsel %vm241, %v238, %v240
  %v246 = vsel %vm59, %v242, 0.0
  %v247 = vsel %vm60, %v243, 0.0
  %v250 = vrot.slane %v246, 4
  %v251 = vrot.slane %v247, 4
  %254 = vst [vmem:[#allocation3 + $0x40] sm:$0xf0] %v250
  %255 = vst [vmem:[#allocation3 + $0x48] sm:$0xf0] %v251
  %256 = vst [vmem:[#allocation3 + $0x50] sm:$0xf0] %v246
  %257 = vst [vmem:[#allocation3 + $0x58] sm:$0xf0] %v247
  %v258 = vld [vmem:[#allocation2] sm:$0xff]
  %v259 = vld [vmem:[#allocation2 + $0x8] sm:$0xff]
  %v260 = vld [vmem:[#allocation2 + $0x10] sm:$0xff]
  %264 = vrot.lane.b32.xlu0 %v258, 17
  %v265 = vpop.permute.xlu0 %264
  %266 = vrot.lane.b32.xlu0 %v259, 17
  %v267 = vpop.permute.xlu0 %266
  %268 = vrot.lane.b32.xlu0 %v260, 17
  %v269 = vpop.permute.xlu0 %268
  %vm270 = vcmask 138240
  %v271 = vsel %vm270, %v265, %v267
  %v272 = vsel %vm270, %v267, %v269
  %v275 = vsel %vm65, %v271, 0.0
  %v276 = vsel %vm66, %v272, 0.0
  %277 = vst [vmem:[#allocation3 + $0x60] sm:$0xf] %v275
  %278 = vst [vmem:[#allocation3 + $0x68] sm:$0xf] %v276
  %v281 = vrot.slane %v275, 4
  %v282 = vrot.slane %v276, 4
  %285 = vst [vmem:[#allocation3 + $0x70] sm:$0xf] %v281
  %286 = vst [vmem:[#allocation3 + $0x78] sm:$0xf] %v282
  %v287 = vld [vmem:[#allocation2] sm:$0xff]
  %v288 = vld [vmem:[#allocation2 + $0x8] sm:$0xff]
  %v289 = vld [vmem:[#allocation2 + $0x10] sm:$0xff]
  %v293 = vrot.slane %v287, 4
  %v294 = vrot.slane %v288, 4
  %v295 = vrot.slane %v289, 4
  %296 = vrot.lane.b32.xlu0 %v293, 16
  %v297 = vpop.permute.xlu0 %296
  %298 = vrot.lane.b32.xlu0 %v294, 16
  %v299 = vpop.permute.xlu0 %298
  %300 = vrot.lane.b32.xlu0 %v295, 16
  %v301 = vpop.permute.xlu0 %300
  %vm302 = vcmask 130048
  %v303 = vsel %vm302, %v297, %v299
  %v304 = vsel %vm302, %v299, %v301
  %307 = vst [vmem:[#allocation3 + $0x60] sm:$0xf0] %v303
  %308 = vst [vmem:[#allocation3 + $0x68] sm:$0xf0] %v304
  %309 = vrot.lane.b32.xlu0 %v287, 16
  %v310 = vpop.permute.xlu0 %309
  %311 = vrot.lane.b32.xlu0 %v288, 16
  %v312 = vpop.permute.xlu0 %311
  %313 = vrot.lane.b32.xlu0 %v289, 16
  %v314 = vpop.permute.xlu0 %313
  %v315 = vsel %vm302, %v310, %v312
  %v316 = vsel %vm302, %v312, %v314
  %319 = vst [vmem:[#allocation3 + $0x70] sm:$0xf0] %v315
  %320 = vst [vmem:[#allocation3 + $0x78] sm:$0xf0] %v316
  %v321 = vld [vmem:[#allocation2] sm:$0xff]
  %v322 = vld [vmem:[#allocation2 + $0x8] sm:$0xff]
  %v323 = vld [vmem:[#allocation2 + $0x10] sm:$0xff]
  %327 = vrot.lane.b32.xlu0 %v321, 15
  %v328 = vpop.permute.xlu0 %327
  %329 = vrot.lane.b32.xlu0 %v322, 15
  %v330 = vpop.permute.xlu0 %329
  %331 = vrot.lane.b32.xlu0 %v323, 15
  %v332 = vpop.permute.xlu0 %331
  %vm333 = vcmask 121856
  %v334 = vsel %vm333, %v328, %v330
  %v335 = vsel %vm333, %v330, %v332
  %v338 = vsel %vm71, %v334, 0.0
  %v339 = vsel %vm72, %v335, 0.0
  %340 = vst [vmem:[#allocation3 + $0x80] sm:$0xf] %v338
  %341 = vst [vmem:[#allocation3 + $0x88] sm:$0xf] %v339
  %v344 = vrot.slane %v338, 4
  %v345 = vrot.slane %v339, 4
  %348 = vst [vmem:[#allocation3 + $0x90] sm:$0xf] %v344
  %349 = vst [vmem:[#allocation3 + $0x98] sm:$0xf] %v345
  %v350 = vld [vmem:[#allocation2] sm:$0xff]
  %v351 = vld [vmem:[#allocation2 + $0x8] sm:$0xff]
  %v352 = vld [vmem:[#allocation2 + $0x10] sm:$0xff]
  %356 = vrot.lane.b32.xlu0 %v350, 14
  %v357 = vpop.permute.xlu0 %356
  %358 = vrot.lane.b32.xlu0 %v351, 14
  %v359 = vpop.permute.xlu0 %358
  %360 = vrot.lane.b32.xlu0 %v352, 14
  %v361 = vpop.permute.xlu0 %360
  %vm362 = vcmask 113664
  %v363 = vsel %vm362, %v357, %v359
  %v364 = vsel %vm362, %v359, %v361
  %v367 = vsel %vm77, %v363, 0.0
  %v368 = vsel %vm78, %v364, 0.0
  %v371 = vrot.slane %v367, 4
  %v372 = vrot.slane %v368, 4
  %375 = vst [vmem:[#allocation3 + $0x80] sm:$0xf0] %v371
  %376 = vst [vmem:[#allocation3 + $0x88] sm:$0xf0] %v372
  %377 = vst [vmem:[#allocation3 + $0x90] sm:$0xf0] %v367
  %378 = vst [vmem:[#allocation3 + $0x98] sm:$0xf0] %v368
  %v379 = vld [vmem:[#allocation2] sm:$0xff]
  %v380 = vld [vmem:[#allocation2 + $0x8] sm:$0xff]
  %v381 = vld [vmem:[#allocation2 + $0x10] sm:$0xff]
  %385 = vrot.lane.b32.xlu0 %v379, 2
  %v386 = vpop.permute.xlu0 %385
  %387 = vrot.lane.b32.xlu0 %v380, 2
  %v388 = vpop.permute.xlu0 %387
  %389 = vrot.lane.b32.xlu0 %v381, 2
  %v390 = vpop.permute.xlu0 %389
  %vm391 = vcmask 15360
  %v392 = vsel %vm391, %v386, %v388
  %v393 = vsel %vm391, %v388, %v390
  %v396 = vsel %vm59, %v392, 0.0
  %v397 = vsel %vm60, %v393, 0.0
  %398 = vst [vmem:[#allocation3 + $0xa0] sm:$0xf] %v396
  %399 = vst [vmem:[#allocation3 + $0xa8] sm:$0xf] %v397
  %v402 = vrot.slane %v396, 4
  %v403 = vrot.slane %v397, 4
  %406 = vst [vmem:[#allocation3 + $0xb0] sm:$0xf] %v402
  %407 = vst [vmem:[#allocation3 + $0xb8] sm:$0xf] %v403
  %v408 = vld [vmem:[#allocation2] sm:$0xff]
  %v409 = vld [vmem:[#allocation2 + $0x8] sm:$0xff]
  %v410 = vld [vmem:[#allocation2 + $0x10] sm:$0xff]
  %414 = vrot.lane.b32.xlu0 %v408, 1
  %v415 = vpop.permute.xlu0 %414
  %416 = vrot.lane.b32.xlu0 %v409, 1
  %v417 = vpop.permute.xlu0 %416
  %418 = vrot.lane.b32.xlu0 %v410, 1
  %v419 = vpop.permute.xlu0 %418
  %vm420 = vcmask 7168
  %v421 = vsel %vm420, %v415, %v417
  %v422 = vsel %vm420, %v417, %v419
  %v425 = vsel %vm65, %v421, 0.0
  %v426 = vsel %vm66, %v422, 0.0
  %v429 = vrot.slane %v425, 4
  %v430 = vrot.slane %v426, 4
  %433 = vst [vmem:[#allocation3 + $0xa0] sm:$0xf0] %v429
  %434 = vst [vmem:[#allocation3 + $0xa8] sm:$0xf0] %v430
  %435 = vst [vmem:[#allocation3 + $0xb0] sm:$0xf0] %v425
  %436 = vst [vmem:[#allocation3 + $0xb8] sm:$0xf0] %v426
  %v437 = vld [vmem:[#allocation2 + $0x8] sm:$0xff]
  %v438 = vld [vmem:[#allocation2 + $0x10] sm:$0xff]
  %439 = vst [vmem:[#allocation3 + $0xc0] sm:$0xf] %v437
  %440 = vst [vmem:[#allocation3 + $0xc8] sm:$0xf] %v438
  %v443 = vrot.slane %v437, 4
  %v444 = vrot.slane %v438, 4
  %447 = vst [vmem:[#allocation3 + $0xd0] sm:$0xf] %v443
  %448 = vst [vmem:[#allocation3 + $0xd8] sm:$0xf] %v444
  %v449 = vld [vmem:[#allocation2 + $0x8] sm:$0xff]
  %v450 = vld [vmem:[#allocation2 + $0x10] sm:$0xff]
  %v451 = vld [vmem:[#allocation2 + $0x18] sm:$0xff]
  %455 = vrot.lane.b32.xlu0 %v449, 127
  %v456 = vpop.permute.xlu0 %455
  %457 = vrot.lane.b32.xlu0 %v450, 127
  %v458 = vpop.permute.xlu0 %457
  %459 = vrot.lane.b32.xlu0 %v451, 127
  %v460 = vpop.permute.xlu0 %459
  %vm461 = vcmask 1039360
  %v462 = vsel %vm461, %v456, %v458
  %v463 = vsel %vm461, %v458, %v460
  %v466 = vsel %vm71, %v462, 0.0
  %v467 = vsel %vm72, %v463, 0.0
  %v470 = vrot.slane %v466, 4
  %v471 = vrot.slane %v467, 4
  %474 = vst [vmem:[#allocation3 + $0xc0] sm:$0xf0] %v470
  %475 = vst [vmem:[#allocation3 + $0xc8] sm:$0xf0] %v471
  %476 = vst [vmem:[#allocation3 + $0xd0] sm:$0xf0] %v466
  %477 = vst [vmem:[#allocation3 + $0xd8] sm:$0xf0] %v467
  %v478 = vld [vmem:[#allocation2 + $0x8] sm:$0xff]
  %v479 = vld [vmem:[#allocation2 + $0x10] sm:$0xff]
  %v480 = vld [vmem:[#allocation2 + $0x18] sm:$0xff]
  %484 = vrot.lane.b32.xlu0 %v478, 126
  %v485 = vpop.permute.xlu0 %484
  %486 = vrot.lane.b32.xlu0 %v479, 126
  %v487 = vpop.permute.xlu0 %486
  %488 = vrot.lane.b32.xlu0 %v480, 126
  %v489 = vpop.permute.xlu0 %488
  %vm490 = vcmask 1031168
  %v491 = vsel %vm490, %v485, %v487
  %v492 = vsel %vm490, %v487, %v489
  %v495 = vsel %vm77, %v491, 0.0
  %v496 = vsel %vm78, %v492, 0.0
  %497 = vst [vmem:[#allocation3 + $0xe0] sm:$0xf] %v495
  %498 = vst [vmem:[#allocation3 + $0xe8] sm:$0xf] %v496
  %v501 = vrot.slane %v495, 4
  %v502 = vrot.slane %v496, 4
  %505 = vst [vmem:[#allocation3 + $0xf0] sm:$0xf] %v501
  %506 = vst [vmem:[#allocation3 + $0xf8] sm:$0xf] %v502
  %v507 = vld [vmem:[#allocation2 + $0x8] sm:$0xff]
  %v508 = vld [vmem:[#allocation2 + $0x10] sm:$0xff]
  %v509 = vld [vmem:[#allocation2 + $0x18] sm:$0xff]
  %513 = vrot.lane.b32.xlu0 %v507, 114
  %v514 = vpop.permute.xlu0 %513
  %515 = vrot.lane.b32.xlu0 %v508, 114
  %v516 = vpop.permute.xlu0 %515
  %517 = vrot.lane.b32.xlu0 %v509, 114
  %v518 = vpop.permute.xlu0 %517
  %vm519 = vcmask 932864
  %v520 = vsel %vm519, %v514, %v516
  %v521 = vsel %vm519, %v516, %v518
  %v524 = vsel %vm59, %v520, 0.0
  %v525 = vsel %vm60, %v521, 0.0
  %v528 = vrot.slane %v524, 4
  %v529 = vrot.slane %v525, 4
  %532 = vst [vmem:[#allocation3 + $0xe0] sm:$0xf0] %v528
  %533 = vst [vmem:[#allocation3 + $0xe8] sm:$0xf0] %v529
  %534 = vst [vmem:[#allocation3 + $0xf0] sm:$0xf0] %v524
  %535 = vst [vmem:[#allocation3 + $0xf8] sm:$0xf0] %v525
  %v536 = vld [vmem:[#allocation2 + $0x8] sm:$0xff]
  %v537 = vld [vmem:[#allocation2 + $0x10] sm:$0xff]
  %v538 = vld [vmem:[#allocation2 + $0x18] sm:$0xff]
  %542 = vrot.lane.b32.xlu0 %v536, 113
  %v543 = vpop.permute.xlu0 %542
  %544 = vrot.lane.b32.xlu0 %v537, 113
  %v545 = vpop.permute.xlu0 %544
  %546 = vrot.lane.b32.xlu0 %v538, 113
  %v547 = vpop.permute.xlu0 %546
  %vm548 = vcmask 924672
  %v549 = vsel %vm548, %v543, %v545
  %v550 = vsel %vm548, %v545, %v547
  %v553 = vsel %vm65, %v549, 0.0
  %v554 = vsel %vm66, %v550, 0.0
  %555 = vst [vmem:[#allocation3 + $0x100] sm:$0xf] %v553
  %556 = vst [vmem:[#allocation3 + $0x108] sm:$0xf] %v554
  %v559 = vrot.slane %v553, 4
  %v560 = vrot.slane %v554, 4
  %563 = vst [vmem:[#allocation3 + $0x110] sm:$0xf] %v559
  %564 = vst [vmem:[#allocation3 + $0x118] sm:$0xf] %v560
  %v565 = vld [vmem:[#allocation2 + $0x8] sm:$0xff]
  %v566 = vld [vmem:[#allocation2 + $0x10] sm:$0xff]
  %v567 = vld [vmem:[#allocation2 + $0x18] sm:$0xff]
  %v571 = vrot.slane %v565, 4
  %v572 = vrot.slane %v566, 4
  %v573 = vrot.slane %v567, 4
  %574 = vrot.lane.b32.xlu0 %v571, 112
  %v575 = vpop.permute.xlu0 %574
  %576 = vrot.lane.b32.xlu0 %v572, 112
  %v577 = vpop.permute.xlu0 %576
  %578 = vrot.lane.b32.xlu0 %v573, 112
  %v579 = vpop.permute.xlu0 %578
  %vm580 = vcmask 916480
  %v581 = vsel %vm580, %v575, %v577
  %v582 = vsel %vm580, %v577, %v579
  %585 = vst [vmem:[#allocation3 + $0x100] sm:$0xf0] %v581
  %586 = vst [vmem:[#allocation3 + $0x108] sm:$0xf0] %v582
  %587 = vrot.lane.b32.xlu0 %v565, 112
  %v588 = vpop.permute.xlu0 %587
  %589 = vrot.lane.b32.xlu0 %v566, 112
  %v590 = vpop.permute.xlu0 %589
  %591 = vrot.lane.b32.xlu0 %v567, 112
  %v592 = vpop.permute.xlu0 %591
  %v593 = vsel %vm580, %v588, %v590
  %v594 = vsel %vm580, %v590, %v592
  %597 = vst [vmem:[#allocation3 + $0x110] sm:$0xf0] %v593
  %598 = vst [vmem:[#allocation3 + $0x118] sm:$0xf0] %v594
  %v599 = vld [vmem:[#allocation2 + $0x8] sm:$0xff]
  %v600 = vld [vmem:[#allocation2 + $0x10] sm:$0xff]
  %v601 = vld [vmem:[#allocation2 + $0x18] sm:$0xff]
  %605 = vrot.lane.b32.xlu0 %v599, 111
  %v606 = vpop.permute.xlu0 %605
  %607 = vrot.lane.b32.xlu0 %v600, 111
  %v608 = vpop.permute.xlu0 %607
  %609 = vrot.lane.b32.xlu0 %v601, 111
  %v610 = vpop.permute.xlu0 %609
  %vm611 = vcmask 908288
  %v612 = vsel %vm611, %v606, %v608
  %v613 = vsel %vm611, %v608, %v610
  %v616 = vsel %vm71, %v612, 0.0
  %v617 = vsel %vm72, %v613, 0.0
  %618 = vst [vmem:[#allocation3 + $0x120] sm:$0xf] %v616
  %619 = vst [vmem:[#allocation3 + $0x128] sm:$0xf] %v617
  %v622 = vrot.slane %v616, 4
  %v623 = vrot.slane %v617, 4
  %626 = vst [vmem:[#allocation3 + $0x130] sm:$0xf] %v622
  %627 = vst [vmem:[#allocation3 + $0x138] sm:$0xf] %v623
  %v628 = vld [vmem:[#allocation2 + $0x8] sm:$0xff]
  %v629 = vld [vmem:[#allocation2 + $0x10] sm:$0xff]
  %v630 = vld [vmem:[#allocation2 + $0x18] sm:$0xff]
  %634 = vrot.lane.b32.xlu0 %v628, 110
  %v635 = vpop.permute.xlu0 %634
  %636 = vrot.lane.b32.xlu0 %v629, 110
  %v637 = vpop.permute.xlu0 %636
  %638 = vrot.lane.b32.xlu0 %v630, 110
  %v639 = vpop.permute.xlu0 %638
  %vm640 = vcmask 900096
  %v641 = vsel %vm640, %v635, %v637
  %v642 = vsel %vm640, %v637, %v639
  %v645 = vsel %vm77, %v641, 0.0
  %v646 = vsel %vm78, %v642, 0.0
  %v649 = vrot.slane %v645, 4
  %v650 = vrot.slane %v646, 4
  %653 = vst [vmem:[#allocation3 + $0x120] sm:$0xf0] %v649
  %654 = vst [vmem:[#allocation3 + $0x128] sm:$0xf0] %v650
  %655 = vst [vmem:[#allocation3 + $0x130] sm:$0xf0] %v645
  %656 = vst [vmem:[#allocation3 + $0x138] sm:$0xf0] %v646
  %v657 = vld [vmem:[#allocation2 + $0x8] sm:$0xff]
  %v658 = vld [vmem:[#allocation2 + $0x10] sm:$0xff]
  %v659 = vld [vmem:[#allocation2 + $0x18] sm:$0xff]
  %663 = vrot.lane.b32.xlu0 %v657, 98
  %v664 = vpop.permute.xlu0 %663
  %665 = vrot.lane.b32.xlu0 %v658, 98
  %v666 = vpop.permute.xlu0 %665
  %667 = vrot.lane.b32.xlu0 %v659, 98
  %v668 = vpop.permute.xlu0 %667
  %vm669 = vcmask 801792
  %v670 = vsel %vm669, %v664, %v666
  %v671 = vsel %vm669, %v666, %v668
  %v674 = vsel %vm59, %v670, 0.0
  %v675 = vsel %vm60, %v671, 0.0
  %676 = vst [vmem:[#allocation3 + $0x140] sm:$0xf] %v674
  %677 = vst [vmem:[#allocation3 + $0x148] sm:$0xf] %v675
  %v680 = vrot.slane %v674, 4
  %v681 = vrot.slane %v675, 4
  %684 = vst [vmem:[#allocation3 + $0x150] sm:$0xf] %v680
  %685 = vst [vmem:[#allocation3 + $0x158] sm:$0xf] %v681
  %v686 = vld [vmem:[#allocation2 + $0x8] sm:$0xff]
  %v687 = vld [vmem:[#allocation2 + $0x10] sm:$0xff]
  %v688 = vld [vmem:[#allocation2 + $0x18] sm:$0xff]
  %692 = vrot.lane.b32.xlu0 %v686, 97
  %v693 = vpop.permute.xlu0 %692
  %694 = vrot.lane.b32.xlu0 %v687, 97
  %v695 = vpop.permute.xlu0 %694
  %696 = vrot.lane.b32.xlu0 %v688, 97
  %v697 = vpop.permute.xlu0 %696
  %vm698 = vcmask 793600
  %v699 = vsel %vm698, %v693, %v695
  %v700 = vsel %vm698, %v695, %v697
  %v703 = vsel %vm65, %v699, 0.0
  %v704 = vsel %vm66, %v700, 0.0
  %v707 = vrot.slane %v703, 4
  %v708 = vrot.slane %v704, 4
  %711 = vst [vmem:[#allocation3 + $0x140] sm:$0xf0] %v707
  %712 = vst [vmem:[#allocation3 + $0x148] sm:$0xf0] %v708
  %713 = vst [vmem:[#allocation3 + $0x150] sm:$0xf0] %v703
  %714 = vst [vmem:[#allocation3 + $0x158] sm:$0xf0] %v704
  %v715 = vld [vmem:[#allocation2 + $0x8] sm:$0xff]
  %v716 = vld [vmem:[#allocation2 + $0x10] sm:$0xff]
  %v717 = vld [vmem:[#allocation2 + $0x18] sm:$0xff]
  %721 = vrot.lane.b32.xlu0 %v715, 96
  %v722 = vpop.permute.xlu0 %721
  %723 = vrot.lane.b32.xlu0 %v716, 96
  %v724 = vpop.permute.xlu0 %723
  %725 = vrot.lane.b32.xlu0 %v717, 96
  %v726 = vpop.permute.xlu0 %725
  %vm727 = vcmask 785408
  %v728 = vsel %vm727, %v722, %v724
  %v729 = vsel %vm727, %v724, %v726
  %732 = vst [vmem:[#allocation3 + $0x160] sm:$0xf] %v728
  %733 = vst [vmem:[#allocation3 + $0x168] sm:$0xf] %v729
  %v734 = vrot.slane %v715, 4
  %v735 = vrot.slane %v716, 4
  %v736 = vrot.slane %v717, 4
  %737 = vrot.lane.b32.xlu0 %v734, 96
  %v738 = vpop.permute.xlu0 %737
  %739 = vrot.lane.b32.xlu0 %v735, 96
  %v740 = vpop.permute.xlu0 %739
  %741 = vrot.lane.b32.xlu0 %v736, 96
  %v742 = vpop.permute.xlu0 %741
  %v743 = vsel %vm727, %v738, %v740
  %v744 = vsel %vm727, %v740, %v742
  %747 = vst [vmem:[#allocation3 + $0x170] sm:$0xf] %v743
  %748 = vst [vmem:[#allocation3 + $0x178] sm:$0xf] %v744
  %v749 = vld [vmem:[#allocation2 + $0x8] sm:$0xff]
  %v750 = vld [vmem:[#allocation2 + $0x10] sm:$0xff]
  %v751 = vld [vmem:[#allocation2 + $0x18] sm:$0xff]
  %755 = vrot.lane.b32.xlu0 %v749, 95
  %v756 = vpop.permute.xlu0 %755
  %757 = vrot.lane.b32.xlu0 %v750, 95
  %v758 = vpop.permute.xlu0 %757
  %759 = vrot.lane.b32.xlu0 %v751, 95
  %v760 = vpop.permute.xlu0 %759
  %vm761 = vcmask 777216
  %v762 = vsel %vm761, %v756, %v758
  %v763 = vsel %vm761, %v758, %v760
  %v766 = vsel %vm71, %v762, 0.0
  %v767 = vsel %vm72, %v763, 0.0
  %v770 = vrot.slane %v766, 4
  %v771 = vrot.slane %v767, 4
  %774 = vst [vmem:[#allocation3 + $0x160] sm:$0xf0] %v770
  %775 = vst [vmem:[#allocation3 + $0x168] sm:$0xf0] %v771
  %776 = vst [vmem:[#allocation3 + $0x170] sm:$0xf0] %v766
  %777 = vst [vmem:[#allocation3 + $0x178] sm:$0xf0] %v767
  %v778 = vld [vmem:[#allocation2 + $0x8] sm:$0xff]
  %v779 = vld [vmem:[#allocation2 + $0x10] sm:$0xff]
  %v780 = vld [vmem:[#allocation2 + $0x18] sm:$0xff]
  %784 = vrot.lane.b32.xlu0 %v778, 94
  %v785 = vpop.permute.xlu0 %784
  %786 = vrot.lane.b32.xlu0 %v779, 94
  %v787 = vpop.permute.xlu0 %786
  %788 = vrot.lane.b32.xlu0 %v780, 94
  %v789 = vpop.permute.xlu0 %788
  %vm790 = vcmask 769024
  %v791 = vsel %vm790, %v785, %v787
  %v792 = vsel %vm790, %v787, %v789
  %v795 = vsel %vm77, %v791, 0.0
  %v796 = vsel %vm78, %v792, 0.0
  %797 = vst [vmem:[#allocation3 + $0x180] sm:$0xf] %v795
  %798 = vst [vmem:[#allocation3 + $0x188] sm:$0xf] %v796
  %v801 = vrot.slane %v795, 4
  %v802 = vrot.slane %v796, 4
  %805 = vst [vmem:[#allocation3 + $0x190] sm:$0xf] %v801
  %806 = vst [vmem:[#allocation3 + $0x198] sm:$0xf] %v802
  %v807 = vld [vmem:[%s1] sm:$0xff]
  %v808 = vld [vmem:[#allocation3] sm:$0xff]
  %v809 = vld [vmem:[#allocation3 + $0x8] sm:$0xff]
  %v810 = vld [vmem:[#allocation3 + $0x10] sm:$0xff]
  %v811 = vld [vmem:[#allocation3 + $0x18] sm:$0xff]
  %v812 = vld [vmem:[#allocation3 + $0x20] sm:$0xff]
  %v813 = vld [vmem:[#allocation3 + $0x28] sm:$0xff]
  %v814 = vld [vmem:[#allocation3 + $0x30] sm:$0xff]
  %v815 = vld [vmem:[#allocation3 + $0x38] sm:$0xff]
  %v816 = vld [vmem:[#allocation3 + $0x40] sm:$0xff]
  %v817 = vld [vmem:[#allocation3 + $0x48] sm:$0xff]
  %v818 = vld [vmem:[#allocation3 + $0x50] sm:$0xff]
  %v819 = vld [vmem:[#allocation3 + $0x58] sm:$0xff]
  %v820 = vld [vmem:[#allocation3 + $0x60] sm:$0xff]
  %v821 = vld [vmem:[#allocation3 + $0x68] sm:$0xff]
  %v822 = vld [vmem:[#allocation3 + $0x70] sm:$0xff]
  %v823 = vld [vmem:[#allocation3 + $0x78] sm:$0xff]
  %v824 = vld [vmem:[#allocation3 + $0x80] sm:$0xff]
  %v825 = vld [vmem:[#allocation3 + $0x88] sm:$0xff]
  %v826 = vld [vmem:[#allocation3 + $0x90] sm:$0xff]
  %v827 = vld [vmem:[#allocation3 + $0x98] sm:$0xff]
  %v828 = vld [vmem:[#allocation3 + $0xa0] sm:$0xff]
  %v829 = vld [vmem:[#allocation3 + $0xa8] sm:$0xff]
  %v830 = vld [vmem:[#allocation3 + $0xb0] sm:$0xff]
  %v831 = vld [vmem:[#allocation3 + $0xb8] sm:$0xff]
  %v832 = vld [vmem:[#allocation3 + $0xc0] sm:$0xff]
  %v833 = vld [vmem:[#allocation3 + $0xc8] sm:$0xff]
  %v834 = vld [vmem:[#allocation3 + $0xd0] sm:$0xff]
  %v835 = vld [vmem:[#allocation3 + $0xd8] sm:$0xff]
  %v836 = vld [vmem:[#allocation3 + $0xe0] sm:$0xff]
  %v837 = vld [vmem:[#allocation3 + $0xe8] sm:$0xff]
  %v838 = vld [vmem:[#allocation3 + $0xf0] sm:$0xff]
  %v839 = vld [vmem:[#allocation3 + $0xf8] sm:$0xff]
  %v840 = vld [vmem:[#allocation3 + $0x100] sm:$0xff]
  %v841 = vld [vmem:[#allocation3 + $0x108] sm:$0xff]
  %v842 = vld [vmem:[#allocation3 + $0x110] sm:$0xff]
  %v843 = vld [vmem:[#allocation3 + $0x118] sm:$0xff]
  %v844 = vld [vmem:[#allocation3 + $0x120] sm:$0xff]
  %v845 = vld [vmem:[#allocation3 + $0x128] sm:$0xff]
  %v846 = vld [vmem:[#allocation3 + $0x130] sm:$0xff]
  %v847 = vld [vmem:[#allocation3 + $0x138] sm:$0xff]
  %v848 = vld [vmem:[#allocation3 + $0x140] sm:$0xff]
  %v849 = vld [vmem:[#allocation3 + $0x148] sm:$0xff]
  %v850 = vld [vmem:[#allocation3 + $0x150] sm:$0xff]
  %v851 = vld [vmem:[#allocation3 + $0x158] sm:$0xff]
  %v852 = vld [vmem:[#allocation3 + $0x160] sm:$0xff]
  %v853 = vld [vmem:[#allocation3 + $0x168] sm:$0xff]
  %v854 = vld [vmem:[#allocation3 + $0x170] sm:$0xff]
  %v855 = vld [vmem:[#allocation3 + $0x178] sm:$0xff]
  %v856 = vld [vmem:[#allocation3 + $0x180] sm:$0xf]
  %v857 = vld [vmem:[#allocation3 + $0x188] sm:$0xf]
  %v858 = vld [vmem:[#allocation3 + $0x190] sm:$0xf]
  %v859 = vld [vmem:[#allocation3 + $0x198] sm:$0xf]
  %v860 = vld [vmem:[%s2] sm:$0xff]
  %862 = vset.pattern.permute.xlu0 0
  %863 = vperm.xlu0 %862, %v860
  %v864 = vpop.permute.xlu0 %863
  %vm866 = vcmask 818176
  %v868 = vsel %vm866, %v807, 0
  %vm870 = vcmask 1043456
  %v872 = vsel %vm870, %v856, 0
  %v875 = vsel %vm870, %v857, 0
  %v878 = vsel %vm870, %v858, 0
  %v881 = vsel %vm870, %v859, 0
  %883 = vmatpush.msra.mxu0 0.0
  %884 = vmatpush.msra.mxu0 0.0
  %885 = vmatpush.msra.mxu0 0.0
  %886 = vmatpush.msra.mxu0 %v872
  %887 = vmatpush.msra.mxu0 %v852
  %888 = vmatpush.msra.mxu0 %v848
  %889 = vmatpush.msra.mxu0 %v844
  %890 = vmatpush.msra.mxu0 %v840
  %891 = vmatpush.msra.mxu0 %v836
  %892 = vmatpush.msra.mxu0 %v832
  %893 = vmatpush.msra.mxu0 %v828
  %894 = vmatpush.msra.mxu0 %v824
  %895 = vmatpush.msra.mxu0 %v820
  %896 = vmatpush.msra.mxu0 %v816
  %897 = vmatpush.msra.mxu0 %v812
  %898 = vmatpush.msra.mxu0 %v808
  %899 = vmatmul.f32.gmra.mxu0 %v868
  %v900 = vpop.f32.mrf.mxu0
  %v901 = vadd.f32 %v864, %v900
  %902 = vdwg.mxu0
  %903 = vmatpush.msra.mxu0 0.0
  %904 = vmatpush.msra.mxu0 0.0
  %905 = vmatpush.msra.mxu0 0.0
  %906 = vmatpush.msra.mxu0 %v875
  %907 = vmatpush.msra.mxu0 %v853
  %908 = vmatpush.msra.mxu0 %v849
  %909 = vmatpush.msra.mxu0 %v845
  %910 = vmatpush.msra.mxu0 %v841
  %911 = vmatpush.msra.mxu0 %v837
  %912 = vmatpush.msra.mxu0 %v833
  %913 = vmatpush.msra.mxu0 %v829
  %914 = vmatpush.msra.mxu0 %v825
  %915 = vmatpush.msra.mxu0 %v821
  %916 = vmatpush.msra.mxu0 %v817
  %917 = vmatpush.msra.mxu0 %v813
  %918 = vmatpush.msra.mxu0 %v809
  %919 = vmatmul.f32.gmra.mxu0 %v868
  %v920 = vpop.f32.mrf.mxu0
  %v921 = vadd.f32 %v864, %v920
  %922 = vdwg.mxu0
  %923 = vmatpush.msra.mxu0 0.0
  %924 = vmatpush.msra.mxu0 0.0
  %925 = vmatpush.msra.mxu0 0.0
  %926 = vmatpush.msra.mxu0 %v878
  %927 = vmatpush.msra.mxu0 %v854
  %928 = vmatpush.msra.mxu0 %v850
  %929 = vmatpush.msra.mxu0 %v846
  %930 = vmatpush.msra.mxu0 %v842
  %931 = vmatpush.msra.mxu0 %v838
  %932 = vmatpush.msra.mxu0 %v834
  %933 = vmatpush.msra.mxu0 %v830
  %934 = vmatpush.msra.mxu0 %v826
  %935 = vmatpush.msra.mxu0 %v822
  %936 = vmatpush.msra.mxu0 %v818
  %937 = vmatpush.msra.mxu0 %v814
  %938 = vmatpush.msra.mxu0 %v810
  %939 = vmatmul.f32.gmra.mxu0 %v868
  %v940 = vpop.f32.mrf.mxu0
  %v941 = vadd.f32 %v864, %v940
  %942 = vdwg.mxu0
  %943 = vmatpush.msra.mxu0 0.0
  %944 = vmatpush.msra.mxu0 0.0
  %945 = vmatpush.msra.mxu0 0.0
  %946 = vmatpush.msra.mxu0 %v881
  %947 = vmatpush.msra.mxu0 %v855
  %948 = vmatpush.msra.mxu0 %v851
  %949 = vmatpush.msra.mxu0 %v847
  %950 = vmatpush.msra.mxu0 %v843
  %951 = vmatpush.msra.mxu0 %v839
  %952 = vmatpush.msra.mxu0 %v835
  %953 = vmatpush.msra.mxu0 %v831
  %954 = vmatpush.msra.mxu0 %v827
  %955 = vmatpush.msra.mxu0 %v823
  %956 = vmatpush.msra.mxu0 %v819
  %957 = vmatpush.msra.mxu0 %v815
  %958 = vmatpush.msra.mxu0 %v811
  %959 = vmatmul.f32.gmra.mxu0 %v868
  %v960 = vpop.f32.mrf.mxu0
  %v961 = vadd.f32 %v864, %v960
  %962 = vdwg.mxu0
  %v963 = vmax.f32 %v901, 0.0
  %v964 = vmax.f32 %v921, 0.0
  %v965 = vmax.f32 %v941, 0.0
  %v966 = vmax.f32 %v961, 0.0
  %v967 = vadd.f32 %v963, %v964
  %v968 = vadd.f32 %v967, %v965
  %v969 = vadd.f32 %v968, %v966
  %970 = vadd.xlane.f32.xlu0 %v969
  %v971 = vpop.xlane.xlu0 %970
  %v972 = vmul.f32 %v971, 0.001953125
  %v973 = vsub.f32 %v963, %v972
  %v974 = vsub.f32 %v964, %v972
  %v975 = vsub.f32 %v965, %v972
  %v976 = vsub.f32 %v966, %v972
  %v977 = vmul.f32 %v973, %v973
  %v978 = vmul.f32 %v974, %v974
  %v979 = vmul.f32 %v975, %v975
  %v980 = vmul.f32 %v976, %v976
  %v981 = vadd.f32 %v977, %v978
  %v982 = vadd.f32 %v981, %v979
  %v983 = vadd.f32 %v982, %v980
  %984 = vadd.xlane.f32.xlu0 %v983
  %v985 = vpop.xlane.xlu0 %984
  %v986 = vmul.f32 %v985, 0.001953125
  %v987 = vadd.f32 %v986, 1e-05
  %v988 = vrsqrt.pop %v987
  %v989 = vmul.f32 %v988, %v987
  %v990 = vmul.f32 %v989, %v988
  %v991 = vmul.f32 0.5, %v990
  %v992 = vsub.f32 1.5, %v991
  %v993 = vmul.f32 %v988, %v992
  %vm994 = vweird.f32 %v987
  %vm995 = vweird.f32 %v988
  %vm996 = vmor %vm994, %vm995
  %v997 = vsel %vm996, %v988, %v993
  %v998 = vmul.f32 %v973, %v997
  %v999 = vmul.f32 %v974, %v997
  %v1000 = vmul.f32 %v975, %v997
  %v1001 = vmul.f32 %v976, %v997
  %v1002 = vld [vmem:[%s3] sm:$0xff]
  %1004 = vset.pattern.permute.xlu0 0
  %1005 = vperm.xlu0 %1004, %v1002
  %v1006 = vpop.permute.xlu0 %1005
  %v1008 = vmul.f32 %v998, %v1006
  %v1009 = vmul.f32 %v999, %v1006
  %v1010 = vmul.f32 %v1000, %v1006
  %v1011 = vmul.f32 %v1001, %v1006
  %v1012 = vld [vmem:[%s4] sm:$0xff]
  %1014 = vset.pattern.permute.xlu0 0
  %1015 = vperm.xlu0 %1014, %v1012
  %v1016 = vpop.permute.xlu0 %1015
  %v1018 = vadd.f32 %v1008, %v1016
  %v1019 = vadd.f32 %v1009, %v1016
  %v1020 = vadd.f32 %v1010, %v1016
  %v1021 = vadd.f32 %v1011, %v1016
  %1022 = vst [vmem:[%s5] sm:$0xff] %v1018
  %1023 = vst [vmem:[%s5 + $0x8] sm:$0xff] %v1019
  %s1024 = scalar_lea.vmem %s5, 16
  %1025 = vst [vmem:[%s1024] sm:$0xff] %v1020
  %1026 = vst [vmem:[%s1024 + $0x8] sm:$0xff] %v1021
  // Predicated region
  $region22: #{conv2d_block_forward.1} parent=0 // pred_check
    _
  $region23: #{conv2d_block_forward.1} parent=0 // pred_check_branch
    %1028 = sbr.rel (0) target = $region25
  $region24: #{conv2d_block_forward.1} parent=0 // pred_region
    _
  $region25: #{conv2d_block_forward.1} parent=0 // pred_fallthru
    _
  // Predicated region
  $region26: #{conv2d_block_forward.1} parent=0 // pred_check
    _
  $region27: #{conv2d_block_forward.1} parent=0 // pred_check_branch
    %1030 = sbr.rel (0) target = $region29
  $region28: #{conv2d_block_forward.1} parent=0 // pred_region
    _
  $region29: #{conv2d_block_forward.1} parent=0 // pred_fallthru
    _

</llo_original>
